<compile_context>
chip_gen: v5e
topology: v5e:2x2
jax: 0.10.0
libtpu: 0.0.40
codegen_flags: <defaults>
</compile_context>

<pallas_src>
import numpy as np
import jax
import jax.numpy as jnp
from jax import lax
from jax.experimental import pallas as pl
from jax.experimental.pallas import tpu as pltpu


# ----------------------------------------------------------------------------
# The fused Pallas kernel (one image per grid step)
# ----------------------------------------------------------------------------

def _skipnet_kernel(lhs1_ref, xflat_ref, w1b_ref, b1_ref, w2b_ref, b2_ref,
                    wf1x_ref, wf1s_ref, bf1_ref, wf2_ref, bf2_ref, out_ref):
    f32 = jnp.float32

    # ---- conv1 (5x5, 1->10) + 2x2 maxpool + bias + relu: ONE MXU matmul ------------------
    # lhs1[u, r*28+jj] = x[2u+r, jj]  (r = 0..5 input rows feeding pooled output row u).
    # w1b columns encode (hp, wp, v, o): column (2*hp+wp)*128 + v*10 + o holds the conv1
    # weight for output pixel (2u+hp, 2v+wp), so the 2x2 pool is a max over four
    # lane-tile-aligned 128-wide column blocks.
    lhs1 = lhs1_ref[0]                                                       # (12, 168)
    c1 = jnp.dot(lhs1, w1b_ref[...], preferred_element_type=f32)            # (12, 512)
    m1 = jnp.maximum(jnp.maximum(c1[:, 0:128], c1[:, 128:256]),
                     jnp.maximum(c1[:, 256:384], c1[:, 384:512]))            # (12, 128)
    # pool-before-bias is exact: bias is constant over each 2x2 window.
    h1 = jnp.maximum(m1 + b1_ref[...], 0.0)          # rows u=0..11, lanes v*10+o (>=120 are 0)

    # ---- conv2 (5x5, 10->20; Dropout2d == identity in eval) + pool + bias + relu ---------
    # Gather the 6 h1 rows feeding each pooled output row with static slices, lane-concat
    # them into a (4, 768) im2row LHS, and do ONE matmul against the pooled conv2 RHS.
    rows = []
    for u2 in range(4):
        rows.append(jnp.concatenate(
            [h1[2 * u2 + r:2 * u2 + r + 1, :] for r in range(6)], axis=1))   # (1, 768)
    lhs2 = jnp.concatenate(rows, axis=0)                                     # (4, 768)
    c2 = jnp.dot(lhs2, w2b_ref[...], preferred_element_type=f32)            # (4, 512)
    m2 = jnp.maximum(jnp.maximum(c2[:, 0:128], c2[:, 128:256]),
                     jnp.maximum(c2[:, 256:384], c2[:, 384:512]))            # (4, 128)
    h2 = jnp.maximum(m2 + b2_ref[...], 0.0)          # rows u2=0..3, lanes s*20+c (>=80 are 0)

    # ---- skip concat + fc1 + relu + (dropout == id) + fc2 + log_softmax ------------------
    # Skip activation as one lane-dense (1, 512) slab; wf1s is the matching zero-padded,
    # (u2, s, c)-reordered fc1 weight block, so the whole skip path is ONE matmul.
    skip = jnp.concatenate([h2[u2:u2 + 1, :] for u2 in range(4)], axis=1)    # (1, 512)
    f1 = (jnp.dot(xflat_ref[0], wf1x_ref[...], preferred_element_type=f32)
          + jnp.dot(skip, wf1s_ref[...], preferred_element_type=f32)
          + bf1_ref[...])                                                    # (1, 50)
    f1 = jnp.maximum(f1, 0.0)
    # TODO(synk): F.dropout is an eval-mode identity here (training masks not reproduced).
    f2 = jnp.dot(f1, wf2_ref[...], preferred_element_type=f32) + bf2_ref[...]  # (1, 10)
    z = f2 - jnp.max(f2, axis=-1, keepdims=True)
    out_ref[0] = z - jnp.log(jnp.sum(jnp.exp(z), axis=-1, keepdims=True))


# ----------------------------------------------------------------------------
# Wrapper: batch on a "parallel" grid axis, one image per step
# ----------------------------------------------------------------------------

def skipnet_forward(x_nchw, prepped):
    (w1b, b1l, w2b, b2l, wf1x, wf1s, bf1p, wf2p, bf2p) = prepped
    n = x_nchw.shape[0]
    x_img = x_nchw[:, 0]                                             # (N, 28, 28)
    # Lane-dense "pooled im2row" slab for conv1 (wrapper-side layout plumbing, ~32 KB/img):
    # lhs1[n, u, r*28 + jj] = x[n, 2u + r, jj]
    lhs1 = jnp.stack([x_img[:, 2 * u:2 * u + 6, :].reshape(n, 168) for u in range(12)],
                     axis=1)                                          # (N, 12, 168)
    x_flat = x_nchw.reshape(n, 1, 784)                               # NCHW flatten (C=1)

    in_specs = [
        pl.BlockSpec((1, 12, 168), lambda i: (i, 0, 0)),
        pl.BlockSpec((1, 1, 784), lambda i: (i, 0, 0)),
        pl.BlockSpec((168, 512), lambda i: (0, 0)),
        pl.BlockSpec((1, 128), lambda i: (0, 0)),
        pl.BlockSpec((768, 512), lambda i: (0, 0)),
        pl.BlockSpec((1, 128), lambda i: (0, 0)),
        pl.BlockSpec((784, 50), lambda i: (0, 0)),
        pl.BlockSpec((512, 50), lambda i: (0, 0)),
        pl.BlockSpec((1, 50), lambda i: (0, 0)),
        pl.BlockSpec((50, 10), lambda i: (0, 0)),
        pl.BlockSpec((1, 10), lambda i: (0, 0)),
    ]
    out = pl.pallas_call(
        _skipnet_kernel,
        out_shape=jax.ShapeDtypeStruct((n, 1, 10), jnp.float32),
        grid=(n,),
        in_specs=in_specs,
        out_specs=pl.BlockSpec((1, 1, 10), lambda i: (i, 0, 0)),
        compiler_params=pltpu.CompilerParams(
            dimension_semantics=("parallel",),           # v7x: the two TCs split the batch
            vmem_limit_bytes=32 * 1024 * 1024),
    )(lhs1, x_flat, w1b, b1l, w2b, b2l, wf1x, wf1s, bf1p, wf2p, bf2p)
    return out.reshape(n, 10)


# ----------------------------------------------------------------------------
# One-time parameter re-layout (hoisted OUT of the jitted forward)
# ----------------------------------------------------------------------------

def prepare_params(params):
    w1, b1, w2, b2, wf1, bf1, wf2, bf2 = [np.asarray(p, np.float32) for p in params]

    # conv1 "pooled im2row" RHS: (168, 512).
    # row  = r*28 + jj                      (r = input-row offset within the 6-row window)
    # col  = (2*hp + wp)*128 + v*10 + o     (pool parities hp/wp, pooled col v, channel o)
    # value = w1[o, 0, r - hp, jj - (2v + wp)]  when both kernel offsets are in [0, 5).
    w1b = np.zeros((168, 512), np.float32)
    for hp in range(2):
        for wp in range(2):
            cb = (2 * hp + wp) * 128
            for v in range(12):
                for di in range(5):
                    r = hp + di
                    for dj in range(5):
                        jj = 2 * v + wp + dj
                        w1b[r * 28 + jj, cb + v * 10: cb + v * 10 + 10] = w1[:, 0, di, dj]
    b1l = np.zeros((1, 128), np.float32)
    for v in range(12):
        b1l[0, v * 10: v * 10 + 10] = b1

    # conv2 "pooled im2row" RHS: (768, 512).
    # row  = r*128 + v*10 + o               (r = h1-row offset, lane layout of h1)
    # col  = (2*hp + wp)*128 + s*20 + c     (pooled output col s, channel c)
    w2b = np.zeros((768, 512), np.float32)
    for hp in range(2):
        for wp in range(2):
            cb = (2 * hp + wp) * 128
            for s in range(4):
                for di in range(5):
                    r = hp + di
                    for dj in range(5):
                        v = 2 * s + wp + dj
                        for o in range(10):
                            w2b[r * 128 + v * 10 + o,
                                cb + s * 20: cb + s * 20 + 20] = w2[:, o, di, dj]
    b2l = np.zeros((1, 128), np.float32)
    for s in range(4):
        b2l[0, s * 20: s * 20 + 20] = b2

    # fc1: rows 0..783 act on the flat input; skip rows (torch order 784 + c*16 + u2*4 + s)
    # are permuted into the kernel's (u2, s, c) lane layout and zero-padded to 512 rows so
    # the (1, 512) skip slab multiplies in ONE matmul.
    wf1x = wf1[:784, :]
    wf1s = np.zeros((512, 50), np.float32)
    for u2 in range(4):
        for s in range(4):
            for c in range(20):
                wf1s[u2 * 128 + s * 20 + c, :] = wf1[784 + c * 16 + u2 * 4 + s, :]
    bf1p = bf1.reshape(1, 50)
    wf2p = wf2
    bf2p = bf2.reshape(1, 10)

    return tuple(jnp.asarray(a) for a in
                 (w1b, b1l, w2b, b2l, wf1x, wf1s, bf1p, wf2p, bf2p))


# ----------------------------------------------------------------------------
# Pure-JAX reference (for correctness check)
# ----------------------------------------------------------------------------

def ref_forward(x, params):
    w1, b1, w2, b2, wf1, bf1, wf2, bf2 = params
    dn = ('NCHW', 'OIHW', 'NCHW')

    def pool(y):
        return lax.reduce_window(y, -jnp.inf, lax.max, (1, 1, 2, 2), (1, 1, 2, 2), 'VALID')

    c1 = lax.conv_general_dilated(x, w1, (1, 1), 'VALID', dimension_numbers=dn,
                                  precision=lax.Precision.HIGHEST) + b1[None, :, None, None]
    h1 = jax.nn.relu(pool(c1))
    c2 = lax.conv_general_dilated(h1, w2, (1, 1), 'VALID', dimension_numbers=dn,
                                  precision=lax.Precision.HIGHEST) + b2[None, :, None, None]
    h2 = jax.nn.relu(pool(c2))
    nb = x.shape[0]
    cat = jnp.concatenate([x.reshape(nb, 784), h2.reshape(nb, 320)], axis=1)
    f1 = jax.nn.relu(cat @ wf1 + bf1)
    f2 = f1 @ wf2 + bf2
    return jax.nn.log_softmax(f2, axis=1)


# ----------------------------------------------------------------------------
# Deterministic parameter init + run
# ----------------------------------------------------------------------------

def init_params(key):
    ks = jax.random.split(key, 8)

    def unif(k, shape, fan_in):
        bound = 1.0 / np.sqrt(fan_in)
        return jax.random.uniform(k, shape, jnp.float32, -bound, bound)

    w1 = unif(ks[0], (10, 1, 5, 5), 25)       # torch OIHW
    b1 = unif(ks[1], (10,), 25)
    w2 = unif(ks[2], (20, 10, 5, 5), 250)
    b2 = unif(ks[3], (20,), 250)
    wf1 = unif(ks[4], (1104, 50), 1104)       # stored as (in, out)
    bf1 = unif(ks[5], (50,), 1104)
    wf2 = unif(ks[6], (50, 10), 50)
    bf2 = unif(ks[7], (10,), 50)
    return (w1, b1, w2, b2, wf1, bf1, wf2, bf2)


if __name__ == "__main__":
    key = jax.random.PRNGKey(0)
    kx, kp = jax.random.split(key)
    # Input shape is dictated by the module (x.view(-1, 784) => 1x28x28); small batch = 2.
    x = jax.random.normal(kx, (2, 1, 28, 28), dtype=jnp.float32)
    params = init_params(kp)
    prepped = prepare_params(params)          # one-time weight re-layout, outside the jit

    fwd = jax.jit(skipnet_forward)
    out = jax.block_until_ready(fwd(x, prepped))

    ref = jax.block_until_ready(ref_forward(x, params))
    assert out.shape == (2, 10)
    np.testing.assert_allclose(np.asarray(out), np.asarray(ref), rtol=5e-3, atol=5e-3)

    print("KERNEL_OK")
</pallas_src>

<mosaic_0001>
module attributes {stable_mosaic.version = 11 : i64} {
  func.func @_skipnet_kernel(%arg0: i32, %arg1: memref<1x12x168xf32, #tpu.memory_space<vmem>>, %arg2: memref<1x1x784xf32, #tpu.memory_space<vmem>>, %arg3: memref<168x512xf32, #tpu.memory_space<vmem>>, %arg4: memref<1x128xf32, #tpu.memory_space<vmem>>, %arg5: memref<768x512xf32, #tpu.memory_space<vmem>>, %arg6: memref<1x128xf32, #tpu.memory_space<vmem>>, %arg7: memref<784x50xf32, #tpu.memory_space<vmem>>, %arg8: memref<512x50xf32, #tpu.memory_space<vmem>>, %arg9: memref<1x50xf32, #tpu.memory_space<vmem>>, %arg10: memref<50x10xf32, #tpu.memory_space<vmem>>, %arg11: memref<1x10xf32, #tpu.memory_space<vmem>>, %arg12: memref<1x1x10xf32, #tpu.memory_space<vmem>>) attributes {dimension_semantics = [#tpu.dimension_semantics<parallel>], iteration_bounds = array<i64: 2>, scalar_prefetch = 0 : i64, scratch_operands = 0 : i64, tpu.core_type = #tpu.core_type<tc>, window_params = [{transform_indices = @transform_0, window_bounds = array<i64: 1, 12, 168>}, {transform_indices = @transform_1, window_bounds = array<i64: 1, 1, 784>}, {pipeline_mode = #tpu.pipeline_mode<synchronous>, transform_indices = @transform_2, window_bounds = array<i64: 168, 512>}, {pipeline_mode = #tpu.pipeline_mode<synchronous>, transform_indices = @transform_3, window_bounds = array<i64: 1, 128>}, {pipeline_mode = #tpu.pipeline_mode<synchronous>, transform_indices = @transform_4, window_bounds = array<i64: 768, 512>}, {pipeline_mode = #tpu.pipeline_mode<synchronous>, transform_indices = @transform_5, window_bounds = array<i64: 1, 128>}, {pipeline_mode = #tpu.pipeline_mode<synchronous>, transform_indices = @transform_6, window_bounds = array<i64: 784, 50>}, {pipeline_mode = #tpu.pipeline_mode<synchronous>, transform_indices = @transform_7, window_bounds = array<i64: 512, 50>}, {pipeline_mode = #tpu.pipeline_mode<synchronous>, transform_indices = @transform_8, window_bounds = array<i64: 1, 50>}, {pipeline_mode = #tpu.pipeline_mode<synchronous>, transform_indices = @transform_9, window_bounds = array<i64: 50, 10>}, {pipeline_mode = #tpu.pipeline_mode<synchronous>, transform_indices = @transform_10, window_bounds = array<i64: 1, 10>}, {transform_indices = @transform_11, window_bounds = array<i64: 1, 1, 10>}]} {
    %c0 = arith.constant 0 : index
    %c0_0 = arith.constant 0 : index
    %c0_1 = arith.constant 0 : index
    %0 = vector.load %arg1[%c0, %c0_0, %c0_1] : memref<1x12x168xf32, #tpu.memory_space<vmem>>, vector<1x12x168xf32>
    %1 = vector.shape_cast %0 : vector<1x12x168xf32> to vector<12x168xf32>
    %c0_2 = arith.constant 0 : index
    %c0_3 = arith.constant 0 : index
    %2 = vector.load %arg3[%c0_2, %c0_3] : memref<168x512xf32, #tpu.memory_space<vmem>>, vector<168x512xf32>
    %cst = arith.constant dense<0.000000e+00> : vector<12x512xf32>
    %3 = tpu.matmul %1, %2, %cst {dimension_numbers = #tpu.dot_dimension_numbers<[1], [0], [0], [1], [0, 0, 1, 1], [], []>} : vector<12x168xf32>, vector<168x512xf32>, vector<12x512xf32> -> vector<12x512xf32>
    %4 = vector.extract_strided_slice %3 {offsets = [0, 0], sizes = [12, 128], strides = [1, 1]} : vector<12x512xf32> to vector<12x128xf32>
    %5 = vector.extract_strided_slice %3 {offsets = [0, 128], sizes = [12, 128], strides = [1, 1]} : vector<12x512xf32> to vector<12x128xf32>
    %6 = arith.maximumf %4, %5 : vector<12x128xf32>
    %7 = vector.extract_strided_slice %3 {offsets = [0, 256], sizes = [12, 128], strides = [1, 1]} : vector<12x512xf32> to vector<12x128xf32>
    %8 = vector.extract_strided_slice %3 {offsets = [0, 384], sizes = [12, 128], strides = [1, 1]} : vector<12x512xf32> to vector<12x128xf32>
    %9 = arith.maximumf %7, %8 : vector<12x128xf32>
    %10 = arith.maximumf %6, %9 : vector<12x128xf32>
    %c0_4 = arith.constant 0 : index
    %c0_5 = arith.constant 0 : index
    %11 = vector.load %arg4[%c0_4, %c0_5] : memref<1x128xf32, #tpu.memory_space<vmem>>, vector<1x128xf32>
    %12 = vector.broadcast %11 : vector<1x128xf32> to vector<12x128xf32>
    %13 = arith.addf %10, %12 : vector<12x128xf32>
    %cst_6 = arith.constant 0.000000e+00 : f32
    %14 = vector.broadcast %cst_6 : f32 to vector<12x128xf32>
    %15 = arith.maximumf %13, %14 : vector<12x128xf32>
    %16 = vector.extract_strided_slice %15 {offsets = [0, 0], sizes = [1, 128], strides = [1, 1]} : vector<12x128xf32> to vector<1x128xf32>
    %17 = vector.extract_strided_slice %15 {offsets = [1, 0], sizes = [1, 128], strides = [1, 1]} : vector<12x128xf32> to vector<1x128xf32>
    %18 = vector.extract_strided_slice %15 {offsets = [2, 0], sizes = [1, 128], strides = [1, 1]} : vector<12x128xf32> to vector<1x128xf32>
    %19 = vector.extract_strided_slice %15 {offsets = [3, 0], sizes = [1, 128], strides = [1, 1]} : vector<12x128xf32> to vector<1x128xf32>
    %20 = vector.extract_strided_slice %15 {offsets = [4, 0], sizes = [1, 128], strides = [1, 1]} : vector<12x128xf32> to vector<1x128xf32>
    %21 = vector.extract_strided_slice %15 {offsets = [5, 0], sizes = [1, 128], strides = [1, 1]} : vector<12x128xf32> to vector<1x128xf32>
    %22 = tpu.concatenate %16, %17, %18, %19, %20, %21 in 1 : vector<1x128xf32>, vector<1x128xf32>, vector<1x128xf32>, vector<1x128xf32>, vector<1x128xf32>, vector<1x128xf32> -> vector<1x768xf32>
    %23 = vector.extract_strided_slice %15 {offsets = [2, 0], sizes = [1, 128], strides = [1, 1]} : vector<12x128xf32> to vector<1x128xf32>
    %24 = vector.extract_strided_slice %15 {offsets = [3, 0], sizes = [1, 128], strides = [1, 1]} : vector<12x128xf32> to vector<1x128xf32>
    %25 = vector.extract_strided_slice %15 {offsets = [4, 0], sizes = [1, 128], strides = [1, 1]} : vector<12x128xf32> to vector<1x128xf32>
    %26 = vector.extract_strided_slice %15 {offsets = [5, 0], sizes = [1, 128], strides = [1, 1]} : vector<12x128xf32> to vector<1x128xf32>
    %27 = vector.extract_strided_slice %15 {offsets = [6, 0], sizes = [1, 128], strides = [1, 1]} : vector<12x128xf32> to vector<1x128xf32>
    %28 = vector.extract_strided_slice %15 {offsets = [7, 0], sizes = [1, 128], strides = [1, 1]} : vector<12x128xf32> to vector<1x128xf32>
    %29 = tpu.concatenate %23, %24, %25, %26, %27, %28 in 1 : vector<1x128xf32>, vector<1x128xf32>, vector<1x128xf32>, vector<1x128xf32>, vector<1x128xf32>, vector<1x128xf32> -> vector<1x768xf32>
    %30 = vector.extract_strided_slice %15 {offsets = [4, 0], sizes = [1, 128], strides = [1, 1]} : vector<12x128xf32> to vector<1x128xf32>
    %31 = vector.extract_strided_slice %15 {offsets = [5, 0], sizes = [1, 128], strides = [1, 1]} : vector<12x128xf32> to vector<1x128xf32>
    %32 = vector.extract_strided_slice %15 {offsets = [6, 0], sizes = [1, 128], strides = [1, 1]} : vector<12x128xf32> to vector<1x128xf32>
    %33 = vector.extract_strided_slice %15 {offsets = [7, 0], sizes = [1, 128], strides = [1, 1]} : vector<12x128xf32> to vector<1x128xf32>
    %34 = vector.extract_strided_slice %15 {offsets = [8, 0], sizes = [1, 128], strides = [1, 1]} : vector<12x128xf32> to vector<1x128xf32>
    %35 = vector.extract_strided_slice %15 {offsets = [9, 0], sizes = [1, 128], strides = [1, 1]} : vector<12x128xf32> to vector<1x128xf32>
    %36 = tpu.concatenate %30, %31, %32, %33, %34, %35 in 1 : vector<1x128xf32>, vector<1x128xf32>, vector<1x128xf32>, vector<1x128xf32>, vector<1x128xf32>, vector<1x128xf32> -> vector<1x768xf32>
    %37 = vector.extract_strided_slice %15 {offsets = [6, 0], sizes = [1, 128], strides = [1, 1]} : vector<12x128xf32> to vector<1x128xf32>
    %38 = vector.extract_strided_slice %15 {offsets = [7, 0], sizes = [1, 128], strides = [1, 1]} : vector<12x128xf32> to vector<1x128xf32>
    %39 = vector.extract_strided_slice %15 {offsets = [8, 0], sizes = [1, 128], strides = [1, 1]} : vector<12x128xf32> to vector<1x128xf32>
    %40 = vector.extract_strided_slice %15 {offsets = [9, 0], sizes = [1, 128], strides = [1, 1]} : vector<12x128xf32> to vector<1x128xf32>
    %41 = vector.extract_strided_slice %15 {offsets = [10, 0], sizes = [1, 128], strides = [1, 1]} : vector<12x128xf32> to vector<1x128xf32>
    %42 = vector.extract_strided_slice %15 {offsets = [11, 0], sizes = [1, 128], strides = [1, 1]} : vector<12x128xf32> to vector<1x128xf32>
    %43 = tpu.concatenate %37, %38, %39, %40, %41, %42 in 1 : vector<1x128xf32>, vector<1x128xf32>, vector<1x128xf32>, vector<1x128xf32>, vector<1x128xf32>, vector<1x128xf32> -> vector<1x768xf32>
    %44 = tpu.concatenate %22, %29, %36, %43 in 0 : vector<1x768xf32>, vector<1x768xf32>, vector<1x768xf32>, vector<1x768xf32> -> vector<4x768xf32>
    %c0_7 = arith.constant 0 : index
    %c0_8 = arith.constant 0 : index
    %45 = vector.load %arg5[%c0_7, %c0_8] : memref<768x512xf32, #tpu.memory_space<vmem>>, vector<768x512xf32>
    %cst_9 = arith.constant dense<0.000000e+00> : vector<4x512xf32>
    %46 = tpu.matmul %44, %45, %cst_9 {dimension_numbers = #tpu.dot_dimension_numbers<[1], [0], [0], [1], [0, 0, 1, 1], [], []>} : vector<4x768xf32>, vector<768x512xf32>, vector<4x512xf32> -> vector<4x512xf32>
    %47 = vector.extract_strided_slice %46 {offsets = [0, 0], sizes = [4, 128], strides = [1, 1]} : vector<4x512xf32> to vector<4x128xf32>
    %48 = vector.extract_strided_slice %46 {offsets = [0, 128], sizes = [4, 128], strides = [1, 1]} : vector<4x512xf32> to vector<4x128xf32>
    %49 = arith.maximumf %47, %48 : vector<4x128xf32>
    %50 = vector.extract_strided_slice %46 {offsets = [0, 256], sizes = [4, 128], strides = [1, 1]} : vector<4x512xf32> to vector<4x128xf32>
    %51 = vector.extract_strided_slice %46 {offsets = [0, 384], sizes = [4, 128], strides = [1, 1]} : vector<4x512xf32> to vector<4x128xf32>
    %52 = arith.maximumf %50, %51 : vector<4x128xf32>
    %53 = arith.maximumf %49, %52 : vector<4x128xf32>
    %c0_10 = arith.constant 0 : index
    %c0_11 = arith.constant 0 : index
    %54 = vector.load %arg6[%c0_10, %c0_11] : memref<1x128xf32, #tpu.memory_space<vmem>>, vector<1x128xf32>
    %55 = vector.broadcast %54 : vector<1x128xf32> to vector<4x128xf32>
    %56 = arith.addf %53, %55 : vector<4x128xf32>
    %cst_12 = arith.constant 0.000000e+00 : f32
    %57 = vector.broadcast %cst_12 : f32 to vector<4x128xf32>
    %58 = arith.maximumf %56, %57 : vector<4x128xf32>
    %59 = vector.extract_strided_slice %58 {offsets = [0, 0], sizes = [1, 128], strides = [1, 1]} : vector<4x128xf32> to vector<1x128xf32>
    %60 = vector.extract_strided_slice %58 {offsets = [1, 0], sizes = [1, 128], strides = [1, 1]} : vector<4x128xf32> to vector<1x128xf32>
    %61 = vector.extract_strided_slice %58 {offsets = [2, 0], sizes = [1, 128], strides = [1, 1]} : vector<4x128xf32> to vector<1x128xf32>
    %62 = vector.extract_strided_slice %58 {offsets = [3, 0], sizes = [1, 128], strides = [1, 1]} : vector<4x128xf32> to vector<1x128xf32>
    %63 = tpu.concatenate %59, %60, %61, %62 in 1 : vector<1x128xf32>, vector<1x128xf32>, vector<1x128xf32>, vector<1x128xf32> -> vector<1x512xf32>
    %c0_13 = arith.constant 0 : index
    %c0_14 = arith.constant 0 : index
    %c0_15 = arith.constant 0 : index
    %64 = vector.load %arg2[%c0_13, %c0_14, %c0_15] : memref<1x1x784xf32, #tpu.memory_space<vmem>>, vector<1x1x784xf32>
    %65 = vector.shape_cast %64 : vector<1x1x784xf32> to vector<1x784xf32>
    %c0_16 = arith.constant 0 : index
    %c0_17 = arith.constant 0 : index
    %66 = vector.load %arg7[%c0_16, %c0_17] : memref<784x50xf32, #tpu.memory_space<vmem>>, vector<784x50xf32>
    %cst_18 = arith.constant dense<0.000000e+00> : vector<1x50xf32>
    %67 = tpu.matmul %65, %66, %cst_18 {dimension_numbers = #tpu.dot_dimension_numbers<[1], [0], [0], [1], [0, 0, 1, 1], [], []>} : vector<1x784xf32>, vector<784x50xf32>, vector<1x50xf32> -> vector<1x50xf32>
    %c0_19 = arith.constant 0 : index
    %c0_20 = arith.constant 0 : index
    %68 = vector.load %arg8[%c0_19, %c0_20] : memref<512x50xf32, #tpu.memory_space<vmem>>, vector<512x50xf32>
    %cst_21 = arith.constant dense<0.000000e+00> : vector<1x50xf32>
    %69 = tpu.matmul %63, %68, %cst_21 {dimension_numbers = #tpu.dot_dimension_numbers<[1], [0], [0], [1], [0, 0, 1, 1], [], []>} : vector<1x512xf32>, vector<512x50xf32>, vector<1x50xf32> -> vector<1x50xf32>
    %70 = arith.addf %67, %69 : vector<1x50xf32>
    %c0_22 = arith.constant 0 : index
    %c0_23 = arith.constant 0 : index
    %71 = vector.load %arg9[%c0_22, %c0_23] : memref<1x50xf32, #tpu.memory_space<vmem>>, vector<1x50xf32>
    %72 = arith.addf %70, %71 : vector<1x50xf32>
    %cst_24 = arith.constant 0.000000e+00 : f32
    %73 = vector.broadcast %cst_24 : f32 to vector<1x50xf32>
    %74 = arith.maximumf %72, %73 : vector<1x50xf32>
    %c0_25 = arith.constant 0 : index
    %c0_26 = arith.constant 0 : index
    %75 = vector.load %arg10[%c0_25, %c0_26] : memref<50x10xf32, #tpu.memory_space<vmem>>, vector<50x10xf32>
    %cst_27 = arith.constant dense<0.000000e+00> : vector<1x10xf32>
    %76 = tpu.matmul %74, %75, %cst_27 {dimension_numbers = #tpu.dot_dimension_numbers<[1], [0], [0], [1], [0, 0, 1, 1], [], []>} : vector<1x50xf32>, vector<50x10xf32>, vector<1x10xf32> -> vector<1x10xf32>
    %c0_28 = arith.constant 0 : index
    %c0_29 = arith.constant 0 : index
    %77 = vector.load %arg11[%c0_28, %c0_29] : memref<1x10xf32, #tpu.memory_space<vmem>>, vector<1x10xf32>
    %78 = arith.addf %76, %77 : vector<1x10xf32>
    %cst_30 = arith.constant dense<0xFF800000> : vector<1xf32>
    %79 = vector.multi_reduction <maximumf>, %78, %cst_30 [1] : vector<1x10xf32> to vector<1xf32>
    %80 = vector.shape_cast %79 : vector<1xf32> to vector<1x1xf32>
    %81 = vector.broadcast %80 : vector<1x1xf32> to vector<1x10xf32>
    %82 = arith.subf %78, %81 : vector<1x10xf32>
    %83 = math.exp %82 : vector<1x10xf32>
    %cst_31 = arith.constant dense<0.000000e+00> : vector<1xf32>
    %84 = vector.multi_reduction <add>, %83, %cst_31 [1] : vector<1x10xf32> to vector<1xf32>
    %85 = vector.shape_cast %84 : vector<1xf32> to vector<1x1xf32>
    %86 = math.log %85 : vector<1x1xf32>
    %87 = vector.broadcast %86 : vector<1x1xf32> to vector<1x10xf32>
    %88 = arith.subf %82, %87 : vector<1x10xf32>
    %c0_32 = arith.constant 0 : index
    %c0_33 = arith.constant 0 : index
    %c0_34 = arith.constant 0 : index
    %89 = vector.load %arg12[%c0_32, %c0_33, %c0_34] : memref<1x1x10xf32, #tpu.memory_space<vmem>>, vector<1x1x10xf32>
    %90 = vector.shape_cast %89 : vector<1x1x10xf32> to vector<1x10xf32>
    %91 = vector.shape_cast %88 : vector<1x10xf32> to vector<1x1x10xf32>
    tpu.vector_store %arg12[%c0_32, %c0_33, %c0_34], %91 {strides = array<i32>} : memref<1x1x10xf32, #tpu.memory_space<vmem>>, vector<1x1x10xf32>,
    return
  }
  func.func @transform_0(%arg0: i32) -> (i32, i32, i32) {
    %c0_i32 = arith.constant 0 : i32
    %c0_i32_0 = arith.constant 0 : i32
    %c0_i32_1 = arith.constant 0 : i32
    return %arg0, %c0_i32, %c0_i32_0 : i32, i32, i32
  }
  func.func @transform_1(%arg0: i32) -> (i32, i32, i32) {
    %c0_i32 = arith.constant 0 : i32
    %c0_i32_0 = arith.constant 0 : i32
    %c0_i32_1 = arith.constant 0 : i32
    return %arg0, %c0_i32, %c0_i32_0 : i32, i32, i32
  }
  func.func @transform_2(%arg0: i32) -> (i32, i32) {
    %c0_i32 = arith.constant 0 : i32
    %c0_i32_0 = arith.constant 0 : i32
    %c0_i32_1 = arith.constant 0 : i32
    return %c0_i32, %c0_i32_0 : i32, i32
  }
  func.func @transform_3(%arg0: i32) -> (i32, i32) {
    %c0_i32 = arith.constant 0 : i32
    %c0_i32_0 = arith.constant 0 : i32
    %c0_i32_1 = arith.constant 0 : i32
    return %c0_i32, %c0_i32_0 : i32, i32
  }
  func.func @transform_4(%arg0: i32) -> (i32, i32) {
    %c0_i32 = arith.constant 0 : i32
    %c0_i32_0 = arith.constant 0 : i32
    %c0_i32_1 = arith.constant 0 : i32
    return %c0_i32, %c0_i32_0 : i32, i32
  }
  func.func @transform_5(%arg0: i32) -> (i32, i32) {
    %c0_i32 = arith.constant 0 : i32
    %c0_i32_0 = arith.constant 0 : i32
    %c0_i32_1 = arith.constant 0 : i32
    return %c0_i32, %c0_i32_0 : i32, i32
  }
  func.func @transform_6(%arg0: i32) -> (i32, i32) {
    %c0_i32 = arith.constant 0 : i32
    %c0_i32_0 = arith.constant 0 : i32
    %c0_i32_1 = arith.constant 0 : i32
    return %c0_i32, %c0_i32_0 : i32, i32
  }
  func.func @transform_7(%arg0: i32) -> (i32, i32) {
    %c0_i32 = arith.constant 0 : i32
    %c0_i32_0 = arith.constant 0 : i32
    %c0_i32_1 = arith.constant 0 : i32
    return %c0_i32, %c0_i32_0 : i32, i32
  }
  func.func @transform_8(%arg0: i32) -> (i32, i32) {
    %c0_i32 = arith.constant 0 : i32
    %c0_i32_0 = arith.constant 0 : i32
    %c0_i32_1 = arith.constant 0 : i32
    return %c0_i32, %c0_i32_0 : i32, i32
  }
  func.func @transform_9(%arg0: i32) -> (i32, i32) {
    %c0_i32 = arith.constant 0 : i32
    %c0_i32_0 = arith.constant 0 : i32
    %c0_i32_1 = arith.constant 0 : i32
    return %c0_i32, %c0_i32_0 : i32, i32
  }
  func.func @transform_10(%arg0: i32) -> (i32, i32) {
    %c0_i32 = arith.constant 0 : i32
    %c0_i32_0 = arith.constant 0 : i32
    %c0_i32_1 = arith.constant 0 : i32
    return %c0_i32, %c0_i32_0 : i32, i32
  }
  func.func @transform_11(%arg0: i32) -> (i32, i32, i32) {
    %c0_i32 = arith.constant 0 : i32
    %c0_i32_0 = arith.constant 0 : i32
    %c0_i32_1 = arith.constant 0 : i32
    return %arg0, %c0_i32, %c0_i32_0 : i32, i32, i32
  }
}

</mosaic_0001>

<llo_original>
// kernel: skipnet_forward.1
$region0: #{skipnet_forward.1}
  #allocation0 [shape = 'u32[]', space=smem, size = 0x4, offset = 0x4, fixed_abs, tag = 'smem constant byte address 0x4 - core index']
  #allocation1 [shape = 'u32[72,128]{1,0:T(1,128)}', space=vmem, size = 0x9000, scoped, tag = 'internal scratch']
  %s0 = inlined_call_operand.vmem [shape: f32[2,12,168], index: 0, kind: input, shape index: {}]
  %s1 = inlined_call_operand.vmem [shape: f32[2,1,784], index: 1, kind: input, shape index: {}]
  %s2 = inlined_call_operand.hbm [shape: f32[168,512], index: 2, kind: input, shape index: {}]
  %s3 = inlined_call_operand.vmem [shape: f32[1,128], index: 3, kind: input, shape index: {}]
  %s4 = inlined_call_operand.vmem [shape: f32[768,512], index: 4, kind: input, shape index: {}]
  %s5 = inlined_call_operand.vmem [shape: f32[1,128], index: 5, kind: input, shape index: {}]
  %s6 = inlined_call_operand.vmem [shape: f32[784,50], index: 6, kind: input, shape index: {}]
  %s7 = inlined_call_operand.vmem [shape: f32[512,50], index: 7, kind: input, shape index: {}]
  %s8 = inlined_call_operand.vmem [shape: f32[1,50], index: 8, kind: input, shape index: {}]
  %s9 = inlined_call_operand.vmem [shape: f32[50,10], index: 9, kind: input, shape index: {}]
  %s10 = inlined_call_operand.vmem [shape: f32[1,10], index: 10, kind: input, shape index: {}]
  %s11 = inlined_call_operand.hbm [shape: f32[2,1,10], index: 11, kind: output, shape index: {}]
  %s12 = sld [smem:[#allocation0]]
  $region81: #{skipnet_forward.1} parent=0
    _
  %s14 = ssub.s32 1, %s12
  %s15 = scalar_select 0, %s14, %s12
  $region1: #{skipnet_forward.1} parent=0
    #allocation2 [shape = 'u8[344064]{0}', space=vmem, size = 0x54000, scoped, tag = 'input window, operand 2, single buffered']
    #allocation3 [shape = 's32[2]{0}', space=sflag, size = 0x8, scoped, tag = 'scoped memory for skipnet_forward.1']
    #allocation4 [shape = 's32[2]{0}', space=sflag, size = 0x8, scoped, tag = 'scoped memory for skipnet_forward.1']
    #allocation5 [shape = 'u8[1024]{0}', space=vmem, size = 0x400, scoped, tag = 'output window, operand 0']
    %16 = vsyncpa [#allocation3], 0
    %17 = vsyncpa [#allocation4], 0
    %s18 = scalar_lea.sflag [#allocation4], 1
    %19 = vsyncpa %s18, 0
    loop: start=0, step=1, limit=4
    $region2: #{skipnet_forward.1} parent=1 // loop_pre_header
      _
    $region3: #{skipnet_forward.1} parent=1 // loop_header
      %s21 = sphi 0, %s25
      %p22 = scmp.ge.s32.totalorder %s21, 4
      %s31 = sphi 0, %s33
      %s34 = sphi 0, %s31
      %s35 = sphi 0, %s34
      %s51 = sphi 0, %s35
      %s57 = sphi 0, %s59
      %s60 = sphi 0, %s57
      %s61 = sphi 0, %s60
      %s77 = sphi 0, %s61
      %s81 = sphi 0, %s81
      %s83 = sphi 0, %s81
      %s84 = sphi 0, %s83
      %s98 = sphi 0, %s84
      %s102 = sphi 0, %s102
      %s104 = sphi 0, %s102
      %s105 = sphi 0, %s104
      %s119 = sphi 0, %s105
      %s123 = sphi 0, %s123
      %s125 = sphi 0, %s123
      %s126 = sphi 0, %s125
      %s140 = sphi 0, %s126
      %s144 = sphi 0, %s144
      %s146 = sphi 0, %s144
      %s147 = sphi 0, %s146
      %s161 = sphi 0, %s147
      %s165 = sphi 0, %s165
      %s167 = sphi 0, %s165
      %s168 = sphi 0, %s167
      %s182 = sphi 0, %s168
      %s186 = sphi 0, %s186
      %s188 = sphi 0, %s186
      %s189 = sphi 0, %s188
      %s203 = sphi 0, %s189
      %s207 = sphi 0, %s207
      %s209 = sphi 0, %s207
      %s210 = sphi 0, %s209
      %s224 = sphi 0, %s210
      %s228 = sphi 0, %s228
      %s230 = sphi 0, %s228
      %s231 = sphi 0, %s230
      %s245 = sphi 0, %s231
      %s249 = sphi 0, %s249
      %s251 = sphi 0, %s249
      %s252 = sphi 0, %s251
      %s266 = sphi 0, %s252
      %s272 = sphi 0, %s274
      %s275 = sphi 0, %s272
      %s276 = sphi 0, %s275
      %s292 = sphi 0, %s276
    $region4: #{skipnet_forward.1} parent=1 // loop_header_branch
      %24 = sbr.rel (%p22) target = $region8
    $region5: #{skipnet_forward.1} parent=1 // loop_body
      %s26 = ssub.s32 %s21, 1
      %s27 = ssub.s32 %s21, 2
      %s28 = sadd.s32 %s21, 1
      %s29 = ssub.s32 %s21, %s28
      %p30 = scmp.eq.s32.totalorder %s29, 0
      %s32 = sadd.s32 %s31, 1
      %s33 = scalar_select %p30, %s31, %s32
      %p36 = pneg %p30
      %p37 = scmp.eq.s32.totalorder %s21, 1
      %p38 = por %p36, %p37
      %p39 = scmp.ne.s32.totalorder %s31, %s34
      %p40 = scmp.eq.s32.totalorder %s21, 0
      %p41 = por %p39, %p40
      %p42 = scmp.ne.s32.totalorder %s31, %s34
      %p43 = scmp.eq.s32.totalorder %s26, 1
      %p44 = por %p42, %p43
      %p45 = scmp.ne.s32.totalorder %s34, %s35
      %p46 = scmp.eq.s32.totalorder %s26, 0
      %p47 = por %p45, %p46
      %p48 = scmp.ne.s32.totalorder %s34, %s35
      %p49 = scmp.eq.s32.totalorder %s27, 1
      %p50 = por %p48, %p49
      %p52 = scmp.ne.s32.totalorder %s35, %s51
      %p53 = scmp.eq.s32.totalorder %s27, 0
      %p54 = por %p52, %p53
      %s55 = ssub.s32 %s21, %s28
      %p56 = scmp.eq.s32.totalorder %s55, 0
      %s58 = sadd.s32 %s57, 1
      %s59 = scalar_select %p56, %s57, %s58
      %p62 = pneg %p56
      %p63 = scmp.eq.s32.totalorder %s21, 1
      %p64 = por %p62, %p63
      %p65 = scmp.ne.s32.totalorder %s57, %s60
      %p66 = scmp.eq.s32.totalorder %s21, 0
      %p67 = por %p65, %p66
      %p68 = scmp.ne.s32.totalorder %s57, %s60
      %p69 = scmp.eq.s32.totalorder %s26, 1
      %p70 = por %p68, %p69
      %p71 = scmp.ne.s32.totalorder %s60, %s61
      %p72 = scmp.eq.s32.totalorder %s26, 0
      %p73 = por %p71, %p72
      %p74 = scmp.ne.s32.totalorder %s60, %s61
      %p75 = scmp.eq.s32.totalorder %s27, 1
      %p76 = por %p74, %p75
      %p78 = scmp.ne.s32.totalorder %s61, %s77
      %p79 = scmp.eq.s32.totalorder %s27, 0
      %p80 = por %p78, %p79
      %s82 = sadd.s32 %s81, 1
      %p85 = scmp.eq.s32.totalorder %s21, 1
      %p86 = scmp.ne.s32.totalorder %s81, %s83
      %p87 = scmp.eq.s32.totalorder %s21, 0
      %p88 = por %p86, %p87
      %p89 = scmp.ne.s32.totalorder %s81, %s83
      %p90 = scmp.eq.s32.totalorder %s26, 1
      %p91 = por %p89, %p90
      %p92 = scmp.ne.s32.totalorder %s83, %s84
      %p93 = scmp.eq.s32.totalorder %s26, 0
      %p94 = por %p92, %p93
      %p95 = scmp.ne.s32.totalorder %s83, %s84
      %p96 = scmp.eq.s32.totalorder %s27, 1
      %p97 = por %p95, %p96
      %p99 = scmp.ne.s32.totalorder %s84, %s98
      %p100 = scmp.eq.s32.totalorder %s27, 0
      %p101 = por %p99, %p100
      %s103 = sadd.s32 %s102, 1
      %p106 = scmp.eq.s32.totalorder %s21, 1
      %p107 = scmp.ne.s32.totalorder %s102, %s104
      %p108 = scmp.eq.s32.totalorder %s21, 0
      %p109 = por %p107, %p108
      %p110 = scmp.ne.s32.totalorder %s102, %s104
      %p111 = scmp.eq.s32.totalorder %s26, 1
      %p112 = por %p110, %p111
      %p113 = scmp.ne.s32.totalorder %s104, %s105
      %p114 = scmp.eq.s32.totalorder %s26, 0
      %p115 = por %p113, %p114
      %p116 = scmp.ne.s32.totalorder %s104, %s105
      %p117 = scmp.eq.s32.totalorder %s27, 1
      %p118 = por %p116, %p117
      %p120 = scmp.ne.s32.totalorder %s105, %s119
      %p121 = scmp.eq.s32.totalorder %s27, 0
      %p122 = por %p120, %p121
      %s124 = sadd.s32 %s123, 1
      %p127 = scmp.eq.s32.totalorder %s21, 1
      %p128 = scmp.ne.s32.totalorder %s123, %s125
      %p129 = scmp.eq.s32.totalorder %s21, 0
      %p130 = por %p128, %p129
      %p131 = scmp.ne.s32.totalorder %s123, %s125
      %p132 = scmp.eq.s32.totalorder %s26, 1
      %p133 = por %p131, %p132
      %p134 = scmp.ne.s32.totalorder %s125, %s126
      %p135 = scmp.eq.s32.totalorder %s26, 0
      %p136 = por %p134, %p135
      %p137 = scmp.ne.s32.totalorder %s125, %s126
      %p138 = scmp.eq.s32.totalorder %s27, 1
      %p139 = por %p137, %p138
      %p141 = scmp.ne.s32.totalorder %s126, %s140
      %p142 = scmp.eq.s32.totalorder %s27, 0
      %p143 = por %p141, %p142
      %s145 = sadd.s32 %s144, 1
      %p148 = scmp.eq.s32.totalorder %s21, 1
      %p149 = scmp.ne.s32.totalorder %s144, %s146
      %p150 = scmp.eq.s32.totalorder %s21, 0
      %p151 = por %p149, %p150
      %p152 = scmp.ne.s32.totalorder %s144, %s146
      %p153 = scmp.eq.s32.totalorder %s26, 1
      %p154 = por %p152, %p153
      %p155 = scmp.ne.s32.totalorder %s146, %s147
      %p156 = scmp.eq.s32.totalorder %s26, 0
      %p157 = por %p155, %p156
      %p158 = scmp.ne.s32.totalorder %s146, %s147
      %p159 = scmp.eq.s32.totalorder %s27, 1
      %p160 = por %p158, %p159
      %p162 = scmp.ne.s32.totalorder %s147, %s161
      %p163 = scmp.eq.s32.totalorder %s27, 0
      %p164 = por %p162, %p163
      %s166 = sadd.s32 %s165, 1
      %p169 = scmp.eq.s32.totalorder %s21, 1
      %p170 = scmp.ne.s32.totalorder %s165, %s167
      %p171 = scmp.eq.s32.totalorder %s21, 0
      %p172 = por %p170, %p171
      %p173 = scmp.ne.s32.totalorder %s165, %s167
      %p174 = scmp.eq.s32.totalorder %s26, 1
      %p175 = por %p173, %p174
      %p176 = scmp.ne.s32.totalorder %s167, %s168
      %p177 = scmp.eq.s32.totalorder %s26, 0
      %p178 = por %p176, %p177
      %p179 = scmp.ne.s32.totalorder %s167, %s168
      %p180 = scmp.eq.s32.totalorder %s27, 1
      %p181 = por %p179, %p180
      %p183 = scmp.ne.s32.totalorder %s168, %s182
      %p184 = scmp.eq.s32.totalorder %s27, 0
      %p185 = por %p183, %p184
      %s187 = sadd.s32 %s186, 1
      %p190 = scmp.eq.s32.totalorder %s21, 1
      %p191 = scmp.ne.s32.totalorder %s186, %s188
      %p192 = scmp.eq.s32.totalorder %s21, 0
      %p193 = por %p191, %p192
      %p194 = scmp.ne.s32.totalorder %s186, %s188
      %p195 = scmp.eq.s32.totalorder %s26, 1
      %p196 = por %p194, %p195
      %p197 = scmp.ne.s32.totalorder %s188, %s189
      %p198 = scmp.eq.s32.totalorder %s26, 0
      %p199 = por %p197, %p198
      %p200 = scmp.ne.s32.totalorder %s188, %s189
      %p201 = scmp.eq.s32.totalorder %s27, 1
      %p202 = por %p200, %p201
      %p204 = scmp.ne.s32.totalorder %s189, %s203
      %p205 = scmp.eq.s32.totalorder %s27, 0
      %p206 = por %p204, %p205
      %s208 = sadd.s32 %s207, 1
      %p211 = scmp.eq.s32.totalorder %s21, 1
      %p212 = scmp.ne.s32.totalorder %s207, %s209
      %p213 = scmp.eq.s32.totalorder %s21, 0
      %p214 = por %p212, %p213
      %p215 = scmp.ne.s32.totalorder %s207, %s209
      %p216 = scmp.eq.s32.totalorder %s26, 1
      %p217 = por %p215, %p216
      %p218 = scmp.ne.s32.totalorder %s209, %s210
      %p219 = scmp.eq.s32.totalorder %s26, 0
      %p220 = por %p218, %p219
      %p221 = scmp.ne.s32.totalorder %s209, %s210
      %p222 = scmp.eq.s32.totalorder %s27, 1
      %p223 = por %p221, %p222
      %p225 = scmp.ne.s32.totalorder %s210, %s224
      %p226 = scmp.eq.s32.totalorder %s27, 0
      %p227 = por %p225, %p226
      %s229 = sadd.s32 %s228, 1
      %p232 = scmp.eq.s32.totalorder %s21, 1
      %p233 = scmp.ne.s32.totalorder %s228, %s230
      %p234 = scmp.eq.s32.totalorder %s21, 0
      %p235 = por %p233, %p234
      %p236 = scmp.ne.s32.totalorder %s228, %s230
      %p237 = scmp.eq.s32.totalorder %s26, 1
      %p238 = por %p236, %p237
      %p239 = scmp.ne.s32.totalorder %s230, %s231
      %p240 = scmp.eq.s32.totalorder %s26, 0
      %p241 = por %p239, %p240
      %p242 = scmp.ne.s32.totalorder %s230, %s231
      %p243 = scmp.eq.s32.totalorder %s27, 1
      %p244 = por %p242, %p243
      %p246 = scmp.ne.s32.totalorder %s231, %s245
      %p247 = scmp.eq.s32.totalorder %s27, 0
      %p248 = por %p246, %p247
      %s250 = sadd.s32 %s249, 1
      %p253 = scmp.eq.s32.totalorder %s21, 1
      %p254 = scmp.ne.s32.totalorder %s249, %s251
      %p255 = scmp.eq.s32.totalorder %s21, 0
      %p256 = por %p254, %p255
      %p257 = scmp.ne.s32.totalorder %s249, %s251
      %p258 = scmp.eq.s32.totalorder %s26, 1
      %p259 = por %p257, %p258
      %p260 = scmp.ne.s32.totalorder %s251, %s252
      %p261 = scmp.eq.s32.totalorder %s26, 0
      %p262 = por %p260, %p261
      %p263 = scmp.ne.s32.totalorder %s251, %s252
      %p264 = scmp.eq.s32.totalorder %s27, 1
      %p265 = por %p263, %p264
      %p267 = scmp.ne.s32.totalorder %s252, %s266
      %p268 = scmp.eq.s32.totalorder %s27, 0
      %p269 = por %p267, %p268
      %s270 = ssub.s32 %s21, %s28
      %p271 = scmp.eq.s32.totalorder %s270, 0
      %s273 = sadd.s32 %s272, 1
      %s274 = scalar_select %p271, %s272, %s273
      %p277 = pneg %p271
      %p278 = scmp.eq.s32.totalorder %s21, 1
      %p279 = por %p277, %p278
      %p280 = scmp.ne.s32.totalorder %s272, %s275
      %p281 = scmp.eq.s32.totalorder %s21, 0
      %p282 = por %p280, %p281
      %p283 = scmp.ne.s32.totalorder %s272, %s275
      %p284 = scmp.eq.s32.totalorder %s26, 1
      %p285 = por %p283, %p284
      %p286 = scmp.ne.s32.totalorder %s275, %s276
      %p287 = scmp.eq.s32.totalorder %s26, 0
      %p288 = por %p286, %p287
      %p289 = scmp.ne.s32.totalorder %s275, %s276
      %p290 = scmp.eq.s32.totalorder %s27, 1
      %p291 = por %p289, %p290
      %p293 = scmp.ne.s32.totalorder %s276, %s292
      %p294 = scmp.eq.s32.totalorder %s27, 0
      %p295 = por %p293, %p294
      %p296 = scmp.le.s32.totalorder 1, %s21
      %p297 = scmp.lt.s32.totalorder %s21, 3
      %p298 = pnand %p296, %p297
      %p299 = pneg %p298
      // Predicated region
      $region9: #{skipnet_forward.1} parent=5 // pred_check
        _
      $region10: #{skipnet_forward.1} parent=5 // pred_check_branch
        %301 = sbr.rel (%p298) target = $region12
      $region11: #{skipnet_forward.1} parent=5 // pred_region
        %s302 = ssub.s32 %s21, 1
        // Predicated region
        $region13: #{skipnet_forward.1} parent=11 // pred_check
          %p303 = pneg %p94
        $region14: #{skipnet_forward.1} parent=11 // pred_check_branch
          %305 = sbr.rel (%p303) target = $region16
        $region15: #{skipnet_forward.1} parent=11 // pred_region
          %307 = vsyncadd [#allocation3], 0
          %s308 = sshll.u32 %s2, 4
          %s309 = int_to_ptr.hbm [resolvable:$true] %s308
          %s310 = sshll.u32 [#allocation2], 4
          %s311 = int_to_ptr.vmem [resolvable:$true] %s310
          %316 = dma.hbm_to_vmem [thread:$0]  %s309, 10752, %s311, [#allocation3], 512, 512, 32
        $region16: #{skipnet_forward.1} parent=11 // pred_fallthru
          _
        // Predicated region
        $region17: #{skipnet_forward.1} parent=11 // pred_check
          %p317 = pneg %p115
        $region18: #{skipnet_forward.1} parent=11 // pred_check_branch
          %319 = sbr.rel (%p317) target = $region20
        $region19: #{skipnet_forward.1} parent=11 // pred_region
          _
        $region20: #{skipnet_forward.1} parent=11 // pred_fallthru
          _
        // Predicated region
        $region21: #{skipnet_forward.1} parent=11 // pred_check
          %p320 = pneg %p136
        $region22: #{skipnet_forward.1} parent=11 // pred_check_branch
          %322 = sbr.rel (%p320) target = $region24
        $region23: #{skipnet_forward.1} parent=11 // pred_region
          _
        $region24: #{skipnet_forward.1} parent=11 // pred_fallthru
          _
        // Predicated region
        $region25: #{skipnet_forward.1} parent=11 // pred_check
          %p323 = pneg %p157
        $region26: #{skipnet_forward.1} parent=11 // pred_check_branch
          %325 = sbr.rel (%p323) target = $region28
        $region27: #{skipnet_forward.1} parent=11 // pred_region
          _
        $region28: #{skipnet_forward.1} parent=11 // pred_fallthru
          _
        // Predicated region
        $region29: #{skipnet_forward.1} parent=11 // pred_check
          %p326 = pneg %p178
        $region30: #{skipnet_forward.1} parent=11 // pred_check_branch
          %328 = sbr.rel (%p326) target = $region32
        $region31: #{skipnet_forward.1} parent=11 // pred_region
          _
        $region32: #{skipnet_forward.1} parent=11 // pred_fallthru
          _
        // Predicated region
        $region33: #{skipnet_forward.1} parent=11 // pred_check
          %p329 = pneg %p199
        $region34: #{skipnet_forward.1} parent=11 // pred_check_branch
          %331 = sbr.rel (%p329) target = $region36
        $region35: #{skipnet_forward.1} parent=11 // pred_region
          _
        $region36: #{skipnet_forward.1} parent=11 // pred_fallthru
          _
        // Predicated region
        $region37: #{skipnet_forward.1} parent=11 // pred_check
          %p332 = pneg %p220
        $region38: #{skipnet_forward.1} parent=11 // pred_check_branch
          %334 = sbr.rel (%p332) target = $region40
        $region39: #{skipnet_forward.1} parent=11 // pred_region
          _
        $region40: #{skipnet_forward.1} parent=11 // pred_fallthru
          _
        // Predicated region
        $region41: #{skipnet_forward.1} parent=11 // pred_check
          %p335 = pneg %p241
        $region42: #{skipnet_forward.1} parent=11 // pred_check_branch
          %337 = sbr.rel (%p335) target = $region44
        $region43: #{skipnet_forward.1} parent=11 // pred_region
          _
        $region44: #{skipnet_forward.1} parent=11 // pred_fallthru
          _
        // Predicated region
        $region45: #{skipnet_forward.1} parent=11 // pred_check
          %p338 = pneg %p262
        $region46: #{skipnet_forward.1} parent=11 // pred_check_branch
          %340 = sbr.rel (%p338) target = $region48
        $region47: #{skipnet_forward.1} parent=11 // pred_region
          _
        $region48: #{skipnet_forward.1} parent=11 // pred_fallthru
          _
      $region12: #{skipnet_forward.1} parent=5 // pred_fallthru
        _
      %p341 = scmp.lt.s32.totalorder %s21, 2
      // Predicated region
      $region49: #{skipnet_forward.1} parent=5 // pred_check
        %p342 = pneg %p341
      $region50: #{skipnet_forward.1} parent=5 // pred_check_branch
        %344 = sbr.rel (%p342) target = $region52
      $region51: #{skipnet_forward.1} parent=5 // pred_region
        // Predicated region
        $region53: #{skipnet_forward.1} parent=51 // pred_check
          %p345 = pneg %p41
        $region54: #{skipnet_forward.1} parent=51 // pred_check_branch
          %347 = sbr.rel (%p345) target = $region56
        $region55: #{skipnet_forward.1} parent=51 // pred_region
          %p348 = scmp.lt.s32.totalorder %s21, 1
          %s349 = scalar_select %p348, %s21, 1
          %s350 = smul.addr %s349, 4
          %s351 = smul.addr %s350, 8
          %s352 = scalar_lea.vmem %s0, %s351
        $region56: #{skipnet_forward.1} parent=51 // pred_fallthru
          _
        // Predicated region
        $region57: #{skipnet_forward.1} parent=51 // pred_check
          %p353 = pneg %p67
        $region58: #{skipnet_forward.1} parent=51 // pred_check_branch
          %355 = sbr.rel (%p353) target = $region60
        $region59: #{skipnet_forward.1} parent=51 // pred_region
          %p356 = scmp.lt.s32.totalorder %s21, 1
          %s357 = scalar_select %p356, %s21, 1
          %s358 = smul.addr %s357, 7
          %s359 = scalar_lea.vmem %s1, %s358
        $region60: #{skipnet_forward.1} parent=51 // pred_fallthru
          _
      $region52: #{skipnet_forward.1} parent=5 // pred_fallthru
        _
      %p360 = scmp.le.s32.totalorder 1, %s21
      %p361 = scmp.lt.s32.totalorder %s21, 3
      %p362 = pnand %p360, %p361
      %p363 = pneg %p362
      // Predicated region
      $region61: #{skipnet_forward.1} parent=5 // pred_check
        _
      $region62: #{skipnet_forward.1} parent=5 // pred_check_branch
        %365 = sbr.rel (%p362) target = $region64
      $region63: #{skipnet_forward.1} parent=5 // pred_region
        %s366 = ssub.s32 %s21, 1
        // Predicated region
        $region65: #{skipnet_forward.1} parent=63 // pred_check
          %p367 = pneg %p94
        $region66: #{skipnet_forward.1} parent=63 // pred_check_branch
          %369 = sbr.rel (%p367) target = $region68
        $region67: #{skipnet_forward.1} parent=63 // pred_region
          %371 = dma.done [#allocation3], 10752
        $region68: #{skipnet_forward.1} parent=63 // pred_fallthru
          _
        %p372 = scmp.lt.s32.totalorder %s26, 1
        %s373 = scalar_select %p372, %s26, 1
        %s374 = smul.addr %s373, 4
        %s375 = smul.addr %s374, 8
        %s376 = scalar_lea.vmem %s0, %s375
        %p377 = pneg %p47
        %p378 = pneg %p44
        %p379 = scmp.lt.s32.totalorder %s26, 1
        %s380 = scalar_select %p379, %s26, 1
        %s381 = smul.addr %s380, 7
        %s382 = scalar_lea.vmem %s1, %s381
        %p383 = pneg %p73
        %p384 = pneg %p70
        %p385 = pneg %p94
        %p386 = pneg %p91
        %p387 = pneg %p115
        %p388 = pneg %p112
        %p389 = pneg %p136
        %p390 = pneg %p133
        %p391 = pneg %p157
        %p392 = pneg %p154
        %p393 = pneg %p178
        %p394 = pneg %p175
        %p395 = pneg %p199
        %p396 = pneg %p196
        %p397 = pneg %p220
        %p398 = pneg %p217
        %p399 = pneg %p241
        %p400 = pneg %p238
        %p401 = pneg %p262
        %p402 = pneg %p259
        %p403 = pneg %p288
        %p404 = pneg %p285
        %s405 = sand.u32 %s275, 1
        %s406 = scalar_lea.sflag [#allocation4], %s405
        %s407 = sand.u32 %s275, 1
        %s408 = scalar_lea.vmem [#allocation5], %s407
        %p409 = scmp.lt.s32.totalorder %s26, 1
        %s410 = scalar_select %p409, %s26, 1
        %s411 = smul.addr %s410, 4
        %s412 = smul.addr %s411, 8
        %s413 = scalar_lea.vmem %s0, %s412
        %p414 = scmp.lt.s32.totalorder %s26, 1
        %s415 = scalar_select %p414, %s26, 1
        %s416 = smul.addr %s415, 7
        %s417 = scalar_lea.vmem %s1, %s416
        %v418 = vld [vmem:[%s413] sm:$0xff]
        %v419 = vld [vmem:[%s413 + $0x8] sm:$0xff]
        %v420 = vld [vmem:[%s413 + $0x10] sm:$0xf]
        %v421 = vld [vmem:[%s413 + $0x18] sm:$0xf]
        %v422 = vld [vmem:[#allocation2] sm:$0xff]
        %v423 = vld [vmem:[#allocation2 + $0x8] sm:$0xff]
        %v424 = vld [vmem:[#allocation2 + $0x10] sm:$0xff]
        %v425 = vld [vmem:[#allocation2 + $0x18] sm:$0xff]
        %v426 = vld [vmem:[#allocation2 + $0x20] sm:$0xff]
        %v427 = vld [vmem:[#allocation2 + $0x28] sm:$0xff]
        %v428 = vld [vmem:[#allocation2 + $0x30] sm:$0xff]
        %v429 = vld [vmem:[#allocation2 + $0x38] sm:$0xff]
        %v430 = vld [vmem:[#allocation2 + $0x40] sm:$0xff]
        %v431 = vld [vmem:[#allocation2 + $0x48] sm:$0xff]
        %v432 = vld [vmem:[#allocation2 + $0x50] sm:$0xff]
        %v433 = vld [vmem:[#allocation2 + $0x58] sm:$0xff]
        %v434 = vld [vmem:[#allocation2 + $0x60] sm:$0xff]
        %v435 = vld [vmem:[#allocation2 + $0x68] sm:$0xff]
        %v436 = vld [vmem:[#allocation2 + $0x70] sm:$0xff]
        %v437 = vld [vmem:[#allocation2 + $0x78] sm:$0xff]
        %v438 = vld [vmem:[#allocation2 + $0x80] sm:$0xff]
        %v439 = vld [vmem:[#allocation2 + $0x88] sm:$0xff]
        %v440 = vld [vmem:[#allocation2 + $0x90] sm:$0xff]
        %v441 = vld [vmem:[#allocation2 + $0x98] sm:$0xff]
        %v442 = vld [vmem:[#allocation2 + $0xa0] sm:$0xff]
        %v443 = vld [vmem:[#allocation2 + $0xa8] sm:$0xff]
        %v444 = vld [vmem:[#allocation2 + $0xb0] sm:$0xff]
        %v445 = vld [vmem:[#allocation2 + $0xb8] sm:$0xff]
        %v446 = vld [vmem:[#allocation2 + $0xc0] sm:$0xff]
        %v447 = vld [vmem:[#allocation2 + $0xc8] sm:$0xff]
        %v448 = vld [vmem:[#allocation2 + $0xd0] sm:$0xff]
        %v449 = vld [vmem:[#allocation2 + $0xd8] sm:$0xff]
        %v450 = vld [vmem:[#allocation2 + $0xe0] sm:$0xff]
        %v451 = vld [vmem:[#allocation2 + $0xe8] sm:$0xff]
        %v452 = vld [vmem:[#allocation2 + $0xf0] sm:$0xff]
        %v453 = vld [vmem:[#allocation2 + $0xf8] sm:$0xff]
        %v454 = vld [vmem:[#allocation2 + $0x100] sm:$0xff]
        %v455 = vld [vmem:[#allocation2 + $0x108] sm:$0xff]
        %v456 = vld [vmem:[#allocation2 + $0x110] sm:$0xff]
        %v457 = vld [vmem:[#allocation2 + $0x118] sm:$0xff]
        %v458 = vld [vmem:[#allocation2 + $0x120] sm:$0xff]
        %v459 = vld [vmem:[#allocation2 + $0x128] sm:$0xff]
        %v460 = vld [vmem:[#allocation2 + $0x130] sm:$0xff]
        %v461 = vld [vmem:[#allocation2 + $0x138] sm:$0xff]
        %v462 = vld [vmem:[#allocation2 + $0x140] sm:$0xff]
        %v463 = vld [vmem:[#allocation2 + $0x148] sm:$0xff]
        %v464 = vld [vmem:[#allocation2 + $0x150] sm:$0xff]
        %v465 = vld [vmem:[#allocation2 + $0x158] sm:$0xff]
        %v466 = vld [vmem:[#allocation2 + $0x160] sm:$0xff]
        %v467 = vld [vmem:[#allocation2 + $0x168] sm:$0xff]
        %v468 = vld [vmem:[#allocation2 + $0x170] sm:$0xff]
        %v469 = vld [vmem:[#allocation2 + $0x178] sm:$0xff]
        %v470 = vld [vmem:[#allocation2 + $0x180] sm:$0xff]
        %v471 = vld [vmem:[#allocation2 + $0x188] sm:$0xff]
        %v472 = vld [vmem:[#allocation2 + $0x190] sm:$0xff]
        %v473 = vld [vmem:[#allocation2 + $0x198] sm:$0xff]
        %v474 = vld [vmem:[#allocation2 + $0x1a0] sm:$0xff]
        %v475 = vld [vmem:[#allocation2 + $0x1a8] sm:$0xff]
        %v476 = vld [vmem:[#allocation2 + $0x1b0] sm:$0xff]
        %v477 = vld [vmem:[#allocation2 + $0x1b8] sm:$0xff]
        %v478 = vld [vmem:[#allocation2 + $0x1c0] sm:$0xff]
        %v479 = vld [vmem:[#allocation2 + $0x1c8] sm:$0xff]
        %v480 = vld [vmem:[#allocation2 + $0x1d0] sm:$0xff]
        %v481 = vld [vmem:[#allocation2 + $0x1d8] sm:$0xff]
        %v482 = vld [vmem:[#allocation2 + $0x1e0] sm:$0xff]
        %v483 = vld [vmem:[#allocation2 + $0x1e8] sm:$0xff]
        %v484 = vld [vmem:[#allocation2 + $0x1f0] sm:$0xff]
        %v485 = vld [vmem:[#allocation2 + $0x1f8] sm:$0xff]
        %v486 = vld [vmem:[#allocation2 + $0x200] sm:$0xff]
        %v487 = vld [vmem:[#allocation2 + $0x208] sm:$0xff]
        %v488 = vld [vmem:[#allocation2 + $0x210] sm:$0xff]
        %v489 = vld [vmem:[#allocation2 + $0x218] sm:$0xff]
        %v490 = vld [vmem:[#allocation2 + $0x220] sm:$0xff]
        %v491 = vld [vmem:[#allocation2 + $0x228] sm:$0xff]
        %v492 = vld [vmem:[#allocation2 + $0x230] sm:$0xff]
        %v493 = vld [vmem:[#allocation2 + $0x238] sm:$0xff]
        %v494 = vld [vmem:[#allocation2 + $0x240] sm:$0xff]
        %v495 = vld [vmem:[#allocation2 + $0x248] sm:$0xff]
        %v496 = vld [vmem:[#allocation2 + $0x250] sm:$0xff]
        %v497 = vld [vmem:[#allocation2 + $0x258] sm:$0xff]
        %v498 = vld [vmem:[#allocation2 + $0x260] sm:$0xff]
        %v499 = vld [vmem:[#allocation2 + $0x268] sm:$0xff]
        %v500 = vld [vmem:[#allocation2 + $0x270] sm:$0xff]
        %v501 = vld [vmem:[#allocation2 + $0x278] sm:$0xff]
        %v502 = vld [vmem:[#allocation2 + $0x280] sm:$0xff]
        %v503 = vld [vmem:[#allocation2 + $0x288] sm:$0xff]
        %v504 = vld [vmem:[#allocation2 + $0x290] sm:$0xff]
        %v505 = vld [vmem:[#allocation2 + $0x298] sm:$0xff]
        %vm506 = vcmask 326656
        %v508 = vsel %vm506, %v419, 0
        %v511 = vsel %vm506, %v421, 0
        %513 = vmatpush.msra.mxu0 %v482
        %514 = vmatpush.msra.mxu0 %v478
        %515 = vmatpush.msra.mxu0 %v474
        %516 = vmatpush.msra.mxu0 %v470
        %517 = vmatpush.msra.mxu0 %v466
        %518 = vmatpush.msra.mxu0 %v462
        %519 = vmatpush.msra.mxu0 %v458
        %520 = vmatpush.msra.mxu0 %v454
        %521 = vmatpush.msra.mxu0 %v450
        %522 = vmatpush.msra.mxu0 %v446
        %523 = vmatpush.msra.mxu0 %v442
        %524 = vmatpush.msra.mxu0 %v438
        %525 = vmatpush.msra.mxu0 %v434
        %526 = vmatpush.msra.mxu0 %v430
        %527 = vmatpush.msra.mxu0 %v426
        %528 = vmatpush.msra.mxu0 %v422
        %529 = vmatmul.f32.gmra.mxu0 %v418
        %v530 = vpop.f32.mrf.mxu0
        %v531 = vadd.f32 0.0, %v530
        %532 = vmatmul.f32.gmra.mxu0 %v420
        %v533 = vpop.f32.mrf.mxu0
        %v534 = vadd.f32 0.0, %v533
        %535 = vdwg.mxu0
        %536 = vmatpush.msra.mxu0 0.0
        %537 = vmatpush.msra.mxu0 0.0
        %538 = vmatpush.msra.mxu0 0.0
        %539 = vmatpush.msra.mxu0 0.0
        %540 = vmatpush.msra.mxu0 0.0
        %541 = vmatpush.msra.mxu0 0.0
        %542 = vmatpush.msra.mxu0 0.0
        %543 = vmatpush.msra.mxu0 0.0
        %544 = vmatpush.msra.mxu0 0.0
        %545 = vmatpush.msra.mxu0 0.0
        %546 = vmatpush.msra.mxu0 0.0
        %547 = vmatpush.msra.mxu0 %v502
        %548 = vmatpush.msra.mxu0 %v498
        %549 = vmatpush.msra.mxu0 %v494
        %550 = vmatpush.msra.mxu0 %v490
        %551 = vmatpush.msra.mxu0 %v486
        %552 = vmatmul.f32.gmra.mxu0 %v508
        %v553 = vpop.f32.mrf.mxu0
        %v554 = vadd.f32 %v531, %v553
        %555 = vmatmul.f32.gmra.mxu0 %v511
        %v556 = vpop.f32.mrf.mxu0
        %v557 = vadd.f32 %v534, %v556
        %558 = vdwg.mxu0
        %559 = vmatpush.msra.mxu0 %v483
        %560 = vmatpush.msra.mxu0 %v479
        %561 = vmatpush.msra.mxu0 %v475
        %562 = vmatpush.msra.mxu0 %v471
        %563 = vmatpush.msra.mxu0 %v467
        %564 = vmatpush.msra.mxu0 %v463
        %565 = vmatpush.msra.mxu0 %v459
        %566 = vmatpush.msra.mxu0 %v455
        %567 = vmatpush.msra.mxu0 %v451
        %568 = vmatpush.msra.mxu0 %v447
        %569 = vmatpush.msra.mxu0 %v443
        %570 = vmatpush.msra.mxu0 %v439
        %571 = vmatpush.msra.mxu0 %v435
        %572 = vmatpush.msra.mxu0 %v431
        %573 = vmatpush.msra.mxu0 %v427
        %574 = vmatpush.msra.mxu0 %v423
        %575 = vmatmul.f32.gmra.mxu0 %v418
        %v576 = vpop.f32.mrf.mxu0
        %v577 = vadd.f32 0.0, %v576
        %578 = vmatmul.f32.gmra.mxu0 %v420
        %v579 = vpop.f32.mrf.mxu0
        %v580 = vadd.f32 0.0, %v579
        %581 = vdwg.mxu0
        %582 = vmatpush.msra.mxu0 0.0
        %583 = vmatpush.msra.mxu0 0.0
        %584 = vmatpush.msra.mxu0 0.0
        %585 = vmatpush.msra.mxu0 0.0
        %586 = vmatpush.msra.mxu0 0.0
        %587 = vmatpush.msra.mxu0 0.0
        %588 = vmatpush.msra.mxu0 0.0
        %589 = vmatpush.msra.mxu0 0.0
        %590 = vmatpush.msra.mxu0 0.0
        %591 = vmatpush.msra.mxu0 0.0
        %592 = vmatpush.msra.mxu0 0.0
        %593 = vmatpush.msra.mxu0 %v503
        %594 = vmatpush.msra.mxu0 %v499
        %595 = vmatpush.msra.mxu0 %v495
        %596 = vmatpush.msra.mxu0 %v491
        %597 = vmatpush.msra.mxu0 %v487
        %598 = vmatmul.f32.gmra.mxu0 %v508
        %v599 = vpop.f32.mrf.mxu0
        %v600 = vadd.f32 %v577, %v599
        %601 = vmatmul.f32.gmra.mxu0 %v511
        %v602 = vpop.f32.mrf.mxu0
        %v603 = vadd.f32 %v580, %v602
        %604 = vdwg.mxu0
        %605 = vmatpush.msra.mxu0 %v484
        %606 = vmatpush.msra.mxu0 %v480
        %607 = vmatpush.msra.mxu0 %v476
        %608 = vmatpush.msra.mxu0 %v472
        %609 = vmatpush.msra.mxu0 %v468
        %610 = vmatpush.msra.mxu0 %v464
        %611 = vmatpush.msra.mxu0 %v460
        %612 = vmatpush.msra.mxu0 %v456
        %613 = vmatpush.msra.mxu0 %v452
        %614 = vmatpush.msra.mxu0 %v448
        %615 = vmatpush.msra.mxu0 %v444
        %616 = vmatpush.msra.mxu0 %v440
        %617 = vmatpush.msra.mxu0 %v436
        %618 = vmatpush.msra.mxu0 %v432
        %619 = vmatpush.msra.mxu0 %v428
        %620 = vmatpush.msra.mxu0 %v424
        %621 = vmatmul.f32.gmra.mxu0 %v418
        %v622 = vpop.f32.mrf.mxu0
        %v623 = vadd.f32 0.0, %v622
        %624 = vmatmul.f32.gmra.mxu0 %v420
        %v625 = vpop.f32.mrf.mxu0
        %v626 = vadd.f32 0.0, %v625
        %627 = vdwg.mxu0
        %628 = vmatpush.msra.mxu0 0.0
        %629 = vmatpush.msra.mxu0 0.0
        %630 = vmatpush.msra.mxu0 0.0
        %631 = vmatpush.msra.mxu0 0.0
        %632 = vmatpush.msra.mxu0 0.0
        %633 = vmatpush.msra.mxu0 0.0
        %634 = vmatpush.msra.mxu0 0.0
        %635 = vmatpush.msra.mxu0 0.0
        %636 = vmatpush.msra.mxu0 0.0
        %637 = vmatpush.msra.mxu0 0.0
        %638 = vmatpush.msra.mxu0 0.0
        %639 = vmatpush.msra.mxu0 %v504
        %640 = vmatpush.msra.mxu0 %v500
        %641 = vmatpush.msra.mxu0 %v496
        %642 = vmatpush.msra.mxu0 %v492
        %643 = vmatpush.msra.mxu0 %v488
        %644 = vmatmul.f32.gmra.mxu0 %v508
        %v645 = vpop.f32.mrf.mxu0
        %v646 = vadd.f32 %v623, %v645
        %647 = vmatmul.f32.gmra.mxu0 %v511
        %v648 = vpop.f32.mrf.mxu0
        %v649 = vadd.f32 %v626, %v648
        %650 = vdwg.mxu0
        %651 = vmatpush.msra.mxu0 %v485
        %652 = vmatpush.msra.mxu0 %v481
        %653 = vmatpush.msra.mxu0 %v477
        %654 = vmatpush.msra.mxu0 %v473
        %655 = vmatpush.msra.mxu0 %v469
        %656 = vmatpush.msra.mxu0 %v465
        %657 = vmatpush.msra.mxu0 %v461
        %658 = vmatpush.msra.mxu0 %v457
        %659 = vmatpush.msra.mxu0 %v453
        %660 = vmatpush.msra.mxu0 %v449
        %661 = vmatpush.msra.mxu0 %v445
        %662 = vmatpush.msra.mxu0 %v441
        %663 = vmatpush.msra.mxu0 %v437
        %664 = vmatpush.msra.mxu0 %v433
        %665 = vmatpush.msra.mxu0 %v429
        %666 = vmatpush.msra.mxu0 %v425
        %667 = vmatmul.f32.gmra.mxu0 %v418
        %v668 = vpop.f32.mrf.mxu0
        %v669 = vadd.f32 0.0, %v668
        %670 = vmatmul.f32.gmra.mxu0 %v420
        %v671 = vpop.f32.mrf.mxu0
        %v672 = vadd.f32 0.0, %v671
        %673 = vdwg.mxu0
        %674 = vmatpush.msra.mxu0 0.0
        %675 = vmatpush.msra.mxu0 0.0
        %676 = vmatpush.msra.mxu0 0.0
        %677 = vmatpush.msra.mxu0 0.0
        %678 = vmatpush.msra.mxu0 0.0
        %679 = vmatpush.msra.mxu0 0.0
        %680 = vmatpush.msra.mxu0 0.0
        %681 = vmatpush.msra.mxu0 0.0
        %682 = vmatpush.msra.mxu0 0.0
        %683 = vmatpush.msra.mxu0 0.0
        %684 = vmatpush.msra.mxu0 0.0
        %685 = vmatpush.msra.mxu0 %v505
        %686 = vmatpush.msra.mxu0 %v501
        %687 = vmatpush.msra.mxu0 %v497
        %688 = vmatpush.msra.mxu0 %v493
        %689 = vmatpush.msra.mxu0 %v489
        %690 = vmatmul.f32.gmra.mxu0 %v508
        %v691 = vpop.f32.mrf.mxu0
        %v692 = vadd.f32 %v669, %v691
        %693 = vmatmul.f32.gmra.mxu0 %v511
        %v694 = vpop.f32.mrf.mxu0
        %v695 = vadd.f32 %v672, %v694
        %696 = vdwg.mxu0
        %v697 = vmax.f32 %v554, %v600
        %v698 = vmax.f32 %v557, %v603
        %v699 = vmax.f32 %v646, %v692
        %v700 = vmax.f32 %v649, %v695
        %v701 = vmax.f32 %v697, %v699
        %v702 = vmax.f32 %v698, %v700
        %v703 = vld [vmem:[%s3] sm:$0x1]
        %v705 = vperm.slane %v703, 0
        %v707 = vadd.f32 %v701, %v705
        %v708 = vadd.f32 %v702, %v705
        %v709 = vmax.f32 %v707, 0.0
        %v710 = vmax.f32 %v708, 0.0
        %v712 = vrot.slane %v709, 1
        %v714 = vrot.slane %v709, 2
        %v716 = vrot.slane %v709, 3
        %v718 = vrot.slane %v709, 4
        %v720 = vrot.slane %v709, 5
        %v723 = vrot.slane %v710, 4
        %v724 = vrot.slane %v710, 5
        %v725 = vrot.slane %v710, 2
        %v726 = vrot.slane %v710, 3
        %v727 = vrot.slane %v712, 1
        %v728 = vrot.slane %v714, 1
        %v729 = vrot.slane %v716, 1
        %v730 = vrot.slane %v718, 1
        %v731 = vrot.slane %v720, 1
        %v737 = vrot.slane %v712, 2
        %v738 = vrot.slane %v714, 2
        %v739 = vrot.slane %v716, 2
        %v740 = vrot.slane %v723, 2
        %v741 = vrot.slane %v724, 2
        %v747 = vrot.slane %v712, 3
        %v748 = vrot.slane %v725, 3
        %v749 = vrot.slane %v726, 3
        %v750 = vrot.slane %v723, 3
        %v751 = vrot.slane %v724, 3
        %vm757 = vcmask 1040384
        %v758 = vsel %vm757, %v709, %v712
        %v759 = vsel %vm757, %v712, %v727
        %v760 = vsel %vm757, %v714, %v728
        %v761 = vsel %vm757, %v716, %v729
        %v762 = vsel %vm757, %v718, %v730
        %v763 = vsel %vm757, %v720, %v731
        %vm764 = vcmask 1041408
        %v765 = vsel %vm764, %v758, %v714
        %v766 = vsel %vm764, %v759, %v737
        %v767 = vsel %vm764, %v760, %v738
        %v768 = vsel %vm764, %v761, %v739
        %v769 = vsel %vm764, %v762, %v740
        %v770 = vsel %vm764, %v763, %v741
        %vm771 = vcmask 1042432
        %v772 = vsel %vm771, %v765, %v716
        %v773 = vsel %vm771, %v766, %v747
        %v774 = vsel %vm771, %v767, %v748
        %v775 = vsel %vm771, %v768, %v749
        %v776 = vsel %vm771, %v769, %v750
        %v777 = vsel %vm771, %v770, %v751
        %v778 = vld [vmem:[%s4] sm:$0xff]
        %v779 = vld [vmem:[%s4 + $0x8] sm:$0xff]
        %v780 = vld [vmem:[%s4 + $0x10] sm:$0xff]
        %v781 = vld [vmem:[%s4 + $0x18] sm:$0xff]
        %v782 = vld [vmem:[%s4 + $0x20] sm:$0xff]
        %v783 = vld [vmem:[%s4 + $0x28] sm:$0xff]
        %v784 = vld [vmem:[%s4 + $0x30] sm:$0xff]
        %v785 = vld [vmem:[%s4 + $0x38] sm:$0xff]
        %v786 = vld [vmem:[%s4 + $0x40] sm:$0xff]
        %v787 = vld [vmem:[%s4 + $0x48] sm:$0xff]
        %v788 = vld [vmem:[%s4 + $0x50] sm:$0xff]
        %v789 = vld [vmem:[%s4 + $0x58] sm:$0xff]
        %v790 = vld [vmem:[%s4 + $0x60] sm:$0xff]
        %v791 = vld [vmem:[%s4 + $0x68] sm:$0xff]
        %v792 = vld [vmem:[%s4 + $0x70] sm:$0xff]
        %v793 = vld [vmem:[%s4 + $0x78] sm:$0xff]
        %v794 = vld [vmem:[%s4 + $0x80] sm:$0xff]
        %v795 = vld [vmem:[%s4 + $0x88] sm:$0xff]
        %v796 = vld [vmem:[%s4 + $0x90] sm:$0xff]
        %v797 = vld [vmem:[%s4 + $0x98] sm:$0xff]
        %v798 = vld [vmem:[%s4 + $0xa0] sm:$0xff]
        %v799 = vld [vmem:[%s4 + $0xa8] sm:$0xff]
        %v800 = vld [vmem:[%s4 + $0xb0] sm:$0xff]
        %v801 = vld [vmem:[%s4 + $0xb8] sm:$0xff]
        %v802 = vld [vmem:[%s4 + $0xc0] sm:$0xff]
        %v803 = vld [vmem:[%s4 + $0xc8] sm:$0xff]
        %v804 = vld [vmem:[%s4 + $0xd0] sm:$0xff]
        %v805 = vld [vmem:[%s4 + $0xd8] sm:$0xff]
        %v806 = vld [vmem:[%s4 + $0xe0] sm:$0xff]
        %v807 = vld [vmem:[%s4 + $0xe8] sm:$0xff]
        %v808 = vld [vmem:[%s4 + $0xf0] sm:$0xff]
        %v809 = vld [vmem:[%s4 + $0xf8] sm:$0xff]
        %v810 = vld [vmem:[%s4 + $0x100] sm:$0xff]
        %v811 = vld [vmem:[%s4 + $0x108] sm:$0xff]
        %v812 = vld [vmem:[%s4 + $0x110] sm:$0xff]
        %v813 = vld [vmem:[%s4 + $0x118] sm:$0xff]
        %v814 = vld [vmem:[%s4 + $0x120] sm:$0xff]
        %v815 = vld [vmem:[%s4 + $0x128] sm:$0xff]
        %v816 = vld [vmem:[%s4 + $0x130] sm:$0xff]
        %v817 = vld [vmem:[%s4 + $0x138] sm:$0xff]
        %v818 = vld [vmem:[%s4 + $0x140] sm:$0xff]
        %v819 = vld [vmem:[%s4 + $0x148] sm:$0xff]
        %v820 = vld [vmem:[%s4 + $0x150] sm:$0xff]
        %v821 = vld [vmem:[%s4 + $0x158] sm:$0xff]
        %v822 = vld [vmem:[%s4 + $0x160] sm:$0xff]
        %v823 = vld [vmem:[%s4 + $0x168] sm:$0xff]
        %v824 = vld [vmem:[%s4 + $0x170] sm:$0xff]
        %v825 = vld [vmem:[%s4 + $0x178] sm:$0xff]
        %v826 = vld [vmem:[%s4 + $0x180] sm:$0xff]
        %v827 = vld [vmem:[%s4 + $0x188] sm:$0xff]
        %v828 = vld [vmem:[%s4 + $0x190] sm:$0xff]
        %v829 = vld [vmem:[%s4 + $0x198] sm:$0xff]
        %v830 = vld [vmem:[%s4 + $0x1a0] sm:$0xff]
        %v831 = vld [vmem:[%s4 + $0x1a8] sm:$0xff]
        %v832 = vld [vmem:[%s4 + $0x1b0] sm:$0xff]
        %v833 = vld [vmem:[%s4 + $0x1b8] sm:$0xff]
        %v834 = vld [vmem:[%s4 + $0x1c0] sm:$0xff]
        %v835 = vld [vmem:[%s4 + $0x1c8] sm:$0xff]
        %v836 = vld [vmem:[%s4 + $0x1d0] sm:$0xff]
        %v837 = vld [vmem:[%s4 + $0x1d8] sm:$0xff]
        %v838 = vld [vmem:[%s4 + $0x1e0] sm:$0xff]
        %v839 = vld [vmem:[%s4 + $0x1e8] sm:$0xff]
        %v840 = vld [vmem:[%s4 + $0x1f0] sm:$0xff]
        %v841 = vld [vmem:[%s4 + $0x1f8] sm:$0xff]
        %v842 = vld [vmem:[%s4 + $0x200] sm:$0xff]
        %v843 = vld [vmem:[%s4 + $0x208] sm:$0xff]
        %v844 = vld [vmem:[%s4 + $0x210] sm:$0xff]
        %v845 = vld [vmem:[%s4 + $0x218] sm:$0xff]
        %v846 = vld [vmem:[%s4 + $0x220] sm:$0xff]
        %v847 = vld [vmem:[%s4 + $0x228] sm:$0xff]
        %v848 = vld [vmem:[%s4 + $0x230] sm:$0xff]
        %v849 = vld [vmem:[%s4 + $0x238] sm:$0xff]
        %v850 = vld [vmem:[%s4 + $0x240] sm:$0xff]
        %v851 = vld [vmem:[%s4 + $0x248] sm:$0xff]
        %v852 = vld [vmem:[%s4 + $0x250] sm:$0xff]
        %v853 = vld [vmem:[%s4 + $0x258] sm:$0xff]
        %v854 = vld [vmem:[%s4 + $0x260] sm:$0xff]
        %v855 = vld [vmem:[%s4 + $0x268] sm:$0xff]
        %v856 = vld [vmem:[%s4 + $0x270] sm:$0xff]
        %v857 = vld [vmem:[%s4 + $0x278] sm:$0xff]
        %v858 = vld [vmem:[%s4 + $0x280] sm:$0xff]
        %v859 = vld [vmem:[%s4 + $0x288] sm:$0xff]
        %v860 = vld [vmem:[%s4 + $0x290] sm:$0xff]
        %v861 = vld [vmem:[%s4 + $0x298] sm:$0xff]
        %v862 = vld [vmem:[%s4 + $0x2a0] sm:$0xff]
        %v863 = vld [vmem:[%s4 + $0x2a8] sm:$0xff]
        %v864 = vld [vmem:[%s4 + $0x2b0] sm:$0xff]
        %v865 = vld [vmem:[%s4 + $0x2b8] sm:$0xff]
        %v866 = vld [vmem:[%s4 + $0x2c0] sm:$0xff]
        %v867 = vld [vmem:[%s4 + $0x2c8] sm:$0xff]
        %v868 = vld [vmem:[%s4 + $0x2d0] sm:$0xff]
        %v869 = vld [vmem:[%s4 + $0x2d8] sm:$0xff]
        %v870 = vld [vmem:[%s4 + $0x2e0] sm:$0xff]
        %v871 = vld [vmem:[%s4 + $0x2e8] sm:$0xff]
        %v872 = vld [vmem:[%s4 + $0x2f0] sm:$0xff]
        %v873 = vld [vmem:[%s4 + $0x2f8] sm:$0xff]
        %v874 = vld [vmem:[%s4 + $0x300] sm:$0xff]
        %v875 = vld [vmem:[%s4 + $0x308] sm:$0xff]
        %v876 = vld [vmem:[%s4 + $0x310] sm:$0xff]
        %v877 = vld [vmem:[%s4 + $0x318] sm:$0xff]
        %v878 = vld [vmem:[%s4 + $0x320] sm:$0xff]
        %v879 = vld [vmem:[%s4 + $0x328] sm:$0xff]
        %v880 = vld [vmem:[%s4 + $0x330] sm:$0xff]
        %v881 = vld [vmem:[%s4 + $0x338] sm:$0xff]
        %v882 = vld [vmem:[%s4 + $0x340] sm:$0xff]
        %v883 = vld [vmem:[%s4 + $0x348] sm:$0xff]
        %v884 = vld [vmem:[%s4 + $0x350] sm:$0xff]
        %v885 = vld [vmem:[%s4 + $0x358] sm:$0xff]
        %v886 = vld [vmem:[%s4 + $0x360] sm:$0xff]
        %v887 = vld [vmem:[%s4 + $0x368] sm:$0xff]
        %v888 = vld [vmem:[%s4 + $0x370] sm:$0xff]
        %v889 = vld [vmem:[%s4 + $0x378] sm:$0xff]
        %v890 = vld [vmem:[%s4 + $0x380] sm:$0xff]
        %v891 = vld [vmem:[%s4 + $0x388] sm:$0xff]
        %v892 = vld [vmem:[%s4 + $0x390] sm:$0xff]
        %v893 = vld [vmem:[%s4 + $0x398] sm:$0xff]
        %v894 = vld [vmem:[%s4 + $0x3a0] sm:$0xff]
        %v895 = vld [vmem:[%s4 + $0x3a8] sm:$0xff]
        %v896 = vld [vmem:[%s4 + $0x3b0] sm:$0xff]
        %v897 = vld [vmem:[%s4 + $0x3b8] sm:$0xff]
        %v898 = vld [vmem:[%s4 + $0x3c0] sm:$0xff]
        %v899 = vld [vmem:[%s4 + $0x3c8] sm:$0xff]
        %v900 = vld [vmem:[%s4 + $0x3d0] sm:$0xff]
        %v901 = vld [vmem:[%s4 + $0x3d8] sm:$0xff]
        %v902 = vld [vmem:[%s4 + $0x3e0] sm:$0xff]
        %v903 = vld [vmem:[%s4 + $0x3e8] sm:$0xff]
        %v904 = vld [vmem:[%s4 + $0x3f0] sm:$0xff]
        %v905 = vld [vmem:[%s4 + $0x3f8] sm:$0xff]
        %v906 = vld [vmem:[%s4 + $0x400] sm:$0xff]
        %v907 = vld [vmem:[%s4 + $0x408] sm:$0xff]
        %v908 = vld [vmem:[%s4 + $0x410] sm:$0xff]
        %v909 = vld [vmem:[%s4 + $0x418] sm:$0xff]
        %v910 = vld [vmem:[%s4 + $0x420] sm:$0xff]
        %v911 = vld [vmem:[%s4 + $0x428] sm:$0xff]
        %v912 = vld [vmem:[%s4 + $0x430] sm:$0xff]
        %v913 = vld [vmem:[%s4 + $0x438] sm:$0xff]
        %v914 = vld [vmem:[%s4 + $0x440] sm:$0xff]
        %v915 = vld [vmem:[%s4 + $0x448] sm:$0xff]
        %v916 = vld [vmem:[%s4 + $0x450] sm:$0xff]
        %v917 = vld [vmem:[%s4 + $0x458] sm:$0xff]
        %v918 = vld [vmem:[%s4 + $0x460] sm:$0xff]
        %v919 = vld [vmem:[%s4 + $0x468] sm:$0xff]
        %v920 = vld [vmem:[%s4 + $0x470] sm:$0xff]
        %v921 = vld [vmem:[%s4 + $0x478] sm:$0xff]
        %v922 = vld [vmem:[%s4 + $0x480] sm:$0xff]
        %v923 = vld [vmem:[%s4 + $0x488] sm:$0xff]
        %v924 = vld [vmem:[%s4 + $0x490] sm:$0xff]
        %v925 = vld [vmem:[%s4 + $0x498] sm:$0xff]
        %v926 = vld [vmem:[%s4 + $0x4a0] sm:$0xff]
        %v927 = vld [vmem:[%s4 + $0x4a8] sm:$0xff]
        %v928 = vld [vmem:[%s4 + $0x4b0] sm:$0xff]
        %v929 = vld [vmem:[%s4 + $0x4b8] sm:$0xff]
        %v930 = vld [vmem:[%s4 + $0x4c0] sm:$0xff]
        %v931 = vld [vmem:[%s4 + $0x4c8] sm:$0xff]
        %v932 = vld [vmem:[%s4 + $0x4d0] sm:$0xff]
        %v933 = vld [vmem:[%s4 + $0x4d8] sm:$0xff]
        %v934 = vld [vmem:[%s4 + $0x4e0] sm:$0xff]
        %v935 = vld [vmem:[%s4 + $0x4e8] sm:$0xff]
        %v936 = vld [vmem:[%s4 + $0x4f0] sm:$0xff]
        %v937 = vld [vmem:[%s4 + $0x4f8] sm:$0xff]
        %v938 = vld [vmem:[%s4 + $0x500] sm:$0xff]
        %v939 = vld [vmem:[%s4 + $0x508] sm:$0xff]
        %v940 = vld [vmem:[%s4 + $0x510] sm:$0xff]
        %v941 = vld [vmem:[%s4 + $0x518] sm:$0xff]
        %v942 = vld [vmem:[%s4 + $0x520] sm:$0xff]
        %v943 = vld [vmem:[%s4 + $0x528] sm:$0xff]
        %v944 = vld [vmem:[%s4 + $0x530] sm:$0xff]
        %v945 = vld [vmem:[%s4 + $0x538] sm:$0xff]
        %v946 = vld [vmem:[%s4 + $0x540] sm:$0xff]
        %v947 = vld [vmem:[%s4 + $0x548] sm:$0xff]
        %v948 = vld [vmem:[%s4 + $0x550] sm:$0xff]
        %v949 = vld [vmem:[%s4 + $0x558] sm:$0xff]
        %v950 = vld [vmem:[%s4 + $0x560] sm:$0xff]
        %v951 = vld [vmem:[%s4 + $0x568] sm:$0xff]
        %v952 = vld [vmem:[%s4 + $0x570] sm:$0xff]
        %v953 = vld [vmem:[%s4 + $0x578] sm:$0xff]
        %v954 = vld [vmem:[%s4 + $0x580] sm:$0xff]
        %v955 = vld [vmem:[%s4 + $0x588] sm:$0xff]
        %v956 = vld [vmem:[%s4 + $0x590] sm:$0xff]
        %v957 = vld [vmem:[%s4 + $0x598] sm:$0xff]
        %v958 = vld [vmem:[%s4 + $0x5a0] sm:$0xff]
        %v959 = vld [vmem:[%s4 + $0x5a8] sm:$0xff]
        %v960 = vld [vmem:[%s4 + $0x5b0] sm:$0xff]
        %v961 = vld [vmem:[%s4 + $0x5b8] sm:$0xff]
        %v962 = vld [vmem:[%s4 + $0x5c0] sm:$0xff]
        %v963 = vld [vmem:[%s4 + $0x5c8] sm:$0xff]
        %v964 = vld [vmem:[%s4 + $0x5d0] sm:$0xff]
        %v965 = vld [vmem:[%s4 + $0x5d8] sm:$0xff]
        %v966 = vld [vmem:[%s4 + $0x5e0] sm:$0xff]
        %v967 = vld [vmem:[%s4 + $0x5e8] sm:$0xff]
        %v968 = vld [vmem:[%s4 + $0x5f0] sm:$0xff]
        %v969 = vld [vmem:[%s4 + $0x5f8] sm:$0xff]
        %v970 = vld [vmem:[%s4 + $0x600] sm:$0xff]
        %v971 = vld [vmem:[%s4 + $0x608] sm:$0xff]
        %v972 = vld [vmem:[%s4 + $0x610] sm:$0xff]
        %v973 = vld [vmem:[%s4 + $0x618] sm:$0xff]
        %v974 = vld [vmem:[%s4 + $0x620] sm:$0xff]
        %v975 = vld [vmem:[%s4 + $0x628] sm:$0xff]
        %v976 = vld [vmem:[%s4 + $0x630] sm:$0xff]
        %v977 = vld [vmem:[%s4 + $0x638] sm:$0xff]
        %v978 = vld [vmem:[%s4 + $0x640] sm:$0xff]
        %v979 = vld [vmem:[%s4 + $0x648] sm:$0xff]
        %v980 = vld [vmem:[%s4 + $0x650] sm:$0xff]
        %v981 = vld [vmem:[%s4 + $0x658] sm:$0xff]
        %v982 = vld [vmem:[%s4 + $0x660] sm:$0xff]
        %v983 = vld [vmem:[%s4 + $0x668] sm:$0xff]
        %v984 = vld [vmem:[%s4 + $0x670] sm:$0xff]
        %v985 = vld [vmem:[%s4 + $0x678] sm:$0xff]
        %v986 = vld [vmem:[%s4 + $0x680] sm:$0xff]
        %v987 = vld [vmem:[%s4 + $0x688] sm:$0xff]
        %v988 = vld [vmem:[%s4 + $0x690] sm:$0xff]
        %v989 = vld [vmem:[%s4 + $0x698] sm:$0xff]
        %v990 = vld [vmem:[%s4 + $0x6a0] sm:$0xff]
        %v991 = vld [vmem:[%s4 + $0x6a8] sm:$0xff]
        %v992 = vld [vmem:[%s4 + $0x6b0] sm:$0xff]
        %v993 = vld [vmem:[%s4 + $0x6b8] sm:$0xff]
        %v994 = vld [vmem:[%s4 + $0x6c0] sm:$0xff]
        %v995 = vld [vmem:[%s4 + $0x6c8] sm:$0xff]
        %v996 = vld [vmem:[%s4 + $0x6d0] sm:$0xff]
        %v997 = vld [vmem:[%s4 + $0x6d8] sm:$0xff]
        %v998 = vld [vmem:[%s4 + $0x6e0] sm:$0xff]
        %v999 = vld [vmem:[%s4 + $0x6e8] sm:$0xff]
        %v1000 = vld [vmem:[%s4 + $0x6f0] sm:$0xff]
        %v1001 = vld [vmem:[%s4 + $0x6f8] sm:$0xff]
        %v1002 = vld [vmem:[%s4 + $0x700] sm:$0xff]
        %v1003 = vld [vmem:[%s4 + $0x708] sm:$0xff]
        %v1004 = vld [vmem:[%s4 + $0x710] sm:$0xff]
        %v1005 = vld [vmem:[%s4 + $0x718] sm:$0xff]
        %v1006 = vld [vmem:[%s4 + $0x720] sm:$0xff]
        %v1007 = vld [vmem:[%s4 + $0x728] sm:$0xff]
        %v1008 = vld [vmem:[%s4 + $0x730] sm:$0xff]
        %v1009 = vld [vmem:[%s4 + $0x738] sm:$0xff]
        %v1010 = vld [vmem:[%s4 + $0x740] sm:$0xff]
        %v1011 = vld [vmem:[%s4 + $0x748] sm:$0xff]
        %v1012 = vld [vmem:[%s4 + $0x750] sm:$0xff]
        %v1013 = vld [vmem:[%s4 + $0x758] sm:$0xff]
        %v1014 = vld [vmem:[%s4 + $0x760] sm:$0xff]
        %v1015 = vld [vmem:[%s4 + $0x768] sm:$0xff]
        %v1016 = vld [vmem:[%s4 + $0x770] sm:$0xff]
        %v1017 = vld [vmem:[%s4 + $0x778] sm:$0xff]
        %v1018 = vld [vmem:[%s4 + $0x780] sm:$0xff]
        %v1019 = vld [vmem:[%s4 + $0x788] sm:$0xff]
        %v1020 = vld [vmem:[%s4 + $0x790] sm:$0xff]
        %v1021 = vld [vmem:[%s4 + $0x798] sm:$0xff]
        %v1022 = vld [vmem:[%s4 + $0x7a0] sm:$0xff]
        %v1023 = vld [vmem:[%s4 + $0x7a8] sm:$0xff]
        %v1024 = vld [vmem:[%s4 + $0x7b0] sm:$0xff]
        %v1025 = vld [vmem:[%s4 + $0x7b8] sm:$0xff]
        %v1026 = vld [vmem:[%s4 + $0x7c0] sm:$0xff]
        %v1027 = vld [vmem:[%s4 + $0x7c8] sm:$0xff]
        %v1028 = vld [vmem:[%s4 + $0x7d0] sm:$0xff]
        %v1029 = vld [vmem:[%s4 + $0x7d8] sm:$0xff]
        %v1030 = vld [vmem:[%s4 + $0x7e0] sm:$0xff]
        %v1031 = vld [vmem:[%s4 + $0x7e8] sm:$0xff]
        %v1032 = vld [vmem:[%s4 + $0x7f0] sm:$0xff]
        %v1033 = vld [vmem:[%s4 + $0x7f8] sm:$0xff]
        %v1034 = vld [vmem:[%s4 + $0x800] sm:$0xff]
        %v1035 = vld [vmem:[%s4 + $0x808] sm:$0xff]
        %v1036 = vld [vmem:[%s4 + $0x810] sm:$0xff]
        %v1037 = vld [vmem:[%s4 + $0x818] sm:$0xff]
        %v1038 = vld [vmem:[%s4 + $0x820] sm:$0xff]
        %v1039 = vld [vmem:[%s4 + $0x828] sm:$0xff]
        %v1040 = vld [vmem:[%s4 + $0x830] sm:$0xff]
        %v1041 = vld [vmem:[%s4 + $0x838] sm:$0xff]
        %v1042 = vld [vmem:[%s4 + $0x840] sm:$0xff]
        %v1043 = vld [vmem:[%s4 + $0x848] sm:$0xff]
        %v1044 = vld [vmem:[%s4 + $0x850] sm:$0xff]
        %v1045 = vld [vmem:[%s4 + $0x858] sm:$0xff]
        %v1046 = vld [vmem:[%s4 + $0x860] sm:$0xff]
        %v1047 = vld [vmem:[%s4 + $0x868] sm:$0xff]
        %v1048 = vld [vmem:[%s4 + $0x870] sm:$0xff]
        %v1049 = vld [vmem:[%s4 + $0x878] sm:$0xff]
        %v1050 = vld [vmem:[%s4 + $0x880] sm:$0xff]
        %v1051 = vld [vmem:[%s4 + $0x888] sm:$0xff]
        %v1052 = vld [vmem:[%s4 + $0x890] sm:$0xff]
        %v1053 = vld [vmem:[%s4 + $0x898] sm:$0xff]
        %v1054 = vld [vmem:[%s4 + $0x8a0] sm:$0xff]
        %v1055 = vld [vmem:[%s4 + $0x8a8] sm:$0xff]
        %v1056 = vld [vmem:[%s4 + $0x8b0] sm:$0xff]
        %v1057 = vld [vmem:[%s4 + $0x8b8] sm:$0xff]
        %v1058 = vld [vmem:[%s4 + $0x8c0] sm:$0xff]
        %v1059 = vld [vmem:[%s4 + $0x8c8] sm:$0xff]
        %v1060 = vld [vmem:[%s4 + $0x8d0] sm:$0xff]
        %v1061 = vld [vmem:[%s4 + $0x8d8] sm:$0xff]
        %v1062 = vld [vmem:[%s4 + $0x8e0] sm:$0xff]
        %v1063 = vld [vmem:[%s4 + $0x8e8] sm:$0xff]
        %v1064 = vld [vmem:[%s4 + $0x8f0] sm:$0xff]
        %v1065 = vld [vmem:[%s4 + $0x8f8] sm:$0xff]
        %v1066 = vld [vmem:[%s4 + $0x900] sm:$0xff]
        %v1067 = vld [vmem:[%s4 + $0x908] sm:$0xff]
        %v1068 = vld [vmem:[%s4 + $0x910] sm:$0xff]
        %v1069 = vld [vmem:[%s4 + $0x918] sm:$0xff]
        %v1070 = vld [vmem:[%s4 + $0x920] sm:$0xff]
        %v1071 = vld [vmem:[%s4 + $0x928] sm:$0xff]
        %v1072 = vld [vmem:[%s4 + $0x930] sm:$0xff]
        %v1073 = vld [vmem:[%s4 + $0x938] sm:$0xff]
        %v1074 = vld [vmem:[%s4 + $0x940] sm:$0xff]
        %v1075 = vld [vmem:[%s4 + $0x948] sm:$0xff]
        %v1076 = vld [vmem:[%s4 + $0x950] sm:$0xff]
        %v1077 = vld [vmem:[%s4 + $0x958] sm:$0xff]
        %v1078 = vld [vmem:[%s4 + $0x960] sm:$0xff]
        %v1079 = vld [vmem:[%s4 + $0x968] sm:$0xff]
        %v1080 = vld [vmem:[%s4 + $0x970] sm:$0xff]
        %v1081 = vld [vmem:[%s4 + $0x978] sm:$0xff]
        %v1082 = vld [vmem:[%s4 + $0x980] sm:$0xff]
        %v1083 = vld [vmem:[%s4 + $0x988] sm:$0xff]
        %v1084 = vld [vmem:[%s4 + $0x990] sm:$0xff]
        %v1085 = vld [vmem:[%s4 + $0x998] sm:$0xff]
        %v1086 = vld [vmem:[%s4 + $0x9a0] sm:$0xff]
        %v1087 = vld [vmem:[%s4 + $0x9a8] sm:$0xff]
        %v1088 = vld [vmem:[%s4 + $0x9b0] sm:$0xff]
        %v1089 = vld [vmem:[%s4 + $0x9b8] sm:$0xff]
        %v1090 = vld [vmem:[%s4 + $0x9c0] sm:$0xff]
        %v1091 = vld [vmem:[%s4 + $0x9c8] sm:$0xff]
        %v1092 = vld [vmem:[%s4 + $0x9d0] sm:$0xff]
        %v1093 = vld [vmem:[%s4 + $0x9d8] sm:$0xff]
        %v1094 = vld [vmem:[%s4 + $0x9e0] sm:$0xff]
        %v1095 = vld [vmem:[%s4 + $0x9e8] sm:$0xff]
        %v1096 = vld [vmem:[%s4 + $0x9f0] sm:$0xff]
        %v1097 = vld [vmem:[%s4 + $0x9f8] sm:$0xff]
        %v1098 = vld [vmem:[%s4 + $0xa00] sm:$0xff]
        %v1099 = vld [vmem:[%s4 + $0xa08] sm:$0xff]
        %v1100 = vld [vmem:[%s4 + $0xa10] sm:$0xff]
        %v1101 = vld [vmem:[%s4 + $0xa18] sm:$0xff]
        %v1102 = vld [vmem:[%s4 + $0xa20] sm:$0xff]
        %v1103 = vld [vmem:[%s4 + $0xa28] sm:$0xff]
        %v1104 = vld [vmem:[%s4 + $0xa30] sm:$0xff]
        %v1105 = vld [vmem:[%s4 + $0xa38] sm:$0xff]
        %v1106 = vld [vmem:[%s4 + $0xa40] sm:$0xff]
        %v1107 = vld [vmem:[%s4 + $0xa48] sm:$0xff]
        %v1108 = vld [vmem:[%s4 + $0xa50] sm:$0xff]
        %v1109 = vld [vmem:[%s4 + $0xa58] sm:$0xff]
        %v1110 = vld [vmem:[%s4 + $0xa60] sm:$0xff]
        %v1111 = vld [vmem:[%s4 + $0xa68] sm:$0xff]
        %v1112 = vld [vmem:[%s4 + $0xa70] sm:$0xff]
        %v1113 = vld [vmem:[%s4 + $0xa78] sm:$0xff]
        %v1114 = vld [vmem:[%s4 + $0xa80] sm:$0xff]
        %v1115 = vld [vmem:[%s4 + $0xa88] sm:$0xff]
        %v1116 = vld [vmem:[%s4 + $0xa90] sm:$0xff]
        %v1117 = vld [vmem:[%s4 + $0xa98] sm:$0xff]
        %v1118 = vld [vmem:[%s4 + $0xaa0] sm:$0xff]
        %v1119 = vld [vmem:[%s4 + $0xaa8] sm:$0xff]
        %v1120 = vld [vmem:[%s4 + $0xab0] sm:$0xff]
        %v1121 = vld [vmem:[%s4 + $0xab8] sm:$0xff]
        %v1122 = vld [vmem:[%s4 + $0xac0] sm:$0xff]
        %v1123 = vld [vmem:[%s4 + $0xac8] sm:$0xff]
        %v1124 = vld [vmem:[%s4 + $0xad0] sm:$0xff]
        %v1125 = vld [vmem:[%s4 + $0xad8] sm:$0xff]
        %v1126 = vld [vmem:[%s4 + $0xae0] sm:$0xff]
        %v1127 = vld [vmem:[%s4 + $0xae8] sm:$0xff]
        %v1128 = vld [vmem:[%s4 + $0xaf0] sm:$0xff]
        %v1129 = vld [vmem:[%s4 + $0xaf8] sm:$0xff]
        %v1130 = vld [vmem:[%s4 + $0xb00] sm:$0xff]
        %v1131 = vld [vmem:[%s4 + $0xb08] sm:$0xff]
        %v1132 = vld [vmem:[%s4 + $0xb10] sm:$0xff]
        %v1133 = vld [vmem:[%s4 + $0xb18] sm:$0xff]
        %v1134 = vld [vmem:[%s4 + $0xb20] sm:$0xff]
        %v1135 = vld [vmem:[%s4 + $0xb28] sm:$0xff]
        %v1136 = vld [vmem:[%s4 + $0xb30] sm:$0xff]
        %v1137 = vld [vmem:[%s4 + $0xb38] sm:$0xff]
        %v1138 = vld [vmem:[%s4 + $0xb40] sm:$0xff]
        %v1139 = vld [vmem:[%s4 + $0xb48] sm:$0xff]
        %v1140 = vld [vmem:[%s4 + $0xb50] sm:$0xff]
        %v1141 = vld [vmem:[%s4 + $0xb58] sm:$0xff]
        %v1142 = vld [vmem:[%s4 + $0xb60] sm:$0xff]
        %v1143 = vld [vmem:[%s4 + $0xb68] sm:$0xff]
        %v1144 = vld [vmem:[%s4 + $0xb70] sm:$0xff]
        %v1145 = vld [vmem:[%s4 + $0xb78] sm:$0xff]
        %v1146 = vld [vmem:[%s4 + $0xb80] sm:$0xff]
        %v1147 = vld [vmem:[%s4 + $0xb88] sm:$0xff]
        %v1148 = vld [vmem:[%s4 + $0xb90] sm:$0xff]
        %v1149 = vld [vmem:[%s4 + $0xb98] sm:$0xff]
        %v1150 = vld [vmem:[%s4 + $0xba0] sm:$0xff]
        %v1151 = vld [vmem:[%s4 + $0xba8] sm:$0xff]
        %v1152 = vld [vmem:[%s4 + $0xbb0] sm:$0xff]
        %v1153 = vld [vmem:[%s4 + $0xbb8] sm:$0xff]
        %v1154 = vld [vmem:[%s4 + $0xbc0] sm:$0xff]
        %v1155 = vld [vmem:[%s4 + $0xbc8] sm:$0xff]
        %v1156 = vld [vmem:[%s4 + $0xbd0] sm:$0xff]
        %v1157 = vld [vmem:[%s4 + $0xbd8] sm:$0xff]
        %v1158 = vld [vmem:[%s4 + $0xbe0] sm:$0xff]
        %v1159 = vld [vmem:[%s4 + $0xbe8] sm:$0xff]
        %v1160 = vld [vmem:[%s4 + $0xbf0] sm:$0xff]
        %v1161 = vld [vmem:[%s4 + $0xbf8] sm:$0xff]
        %1162 = vmatpush.msra.mxu0 %v838
        %1163 = vmatpush.msra.mxu0 %v834
        %1164 = vmatpush.msra.mxu0 %v830
        %1165 = vmatpush.msra.mxu0 %v826
        %1166 = vmatpush.msra.mxu0 %v822
        %1167 = vmatpush.msra.mxu0 %v818
        %1168 = vmatpush.msra.mxu0 %v814
        %1169 = vmatpush.msra.mxu0 %v810
        %1170 = vmatpush.msra.mxu0 %v806
        %1171 = vmatpush.msra.mxu0 %v802
        %1172 = vmatpush.msra.mxu0 %v798
        %1173 = vmatpush.msra.mxu0 %v794
        %1174 = vmatpush.msra.mxu0 %v790
        %1175 = vmatpush.msra.mxu0 %v786
        %1176 = vmatpush.msra.mxu0 %v782
        %1177 = vmatpush.msra.mxu0 %v778
        %1178 = vmatmul.f32.gmra.mxu0 %v772
        %v1179 = vpop.f32.mrf.mxu0
        %v1180 = vadd.f32 0.0, %v1179
        %1181 = vdwg.mxu0
        %1182 = vmatpush.msra.mxu0 %v902
        %1183 = vmatpush.msra.mxu0 %v898
        %1184 = vmatpush.msra.mxu0 %v894
        %1185 = vmatpush.msra.mxu0 %v890
        %1186 = vmatpush.msra.mxu0 %v886
        %1187 = vmatpush.msra.mxu0 %v882
        %1188 = vmatpush.msra.mxu0 %v878
        %1189 = vmatpush.msra.mxu0 %v874
        %1190 = vmatpush.msra.mxu0 %v870
        %1191 = vmatpush.msra.mxu0 %v866
        %1192 = vmatpush.msra.mxu0 %v862
        %1193 = vmatpush.msra.mxu0 %v858
        %1194 = vmatpush.msra.mxu0 %v854
        %1195 = vmatpush.msra.mxu0 %v850
        %1196 = vmatpush.msra.mxu0 %v846
        %1197 = vmatpush.msra.mxu0 %v842
        %1198 = vmatmul.f32.gmra.mxu0 %v773
        %v1199 = vpop.f32.mrf.mxu0
        %v1200 = vadd.f32 %v1180, %v1199
        %1201 = vdwg.mxu0
        %1202 = vmatpush.msra.mxu0 %v966
        %1203 = vmatpush.msra.mxu0 %v962
        %1204 = vmatpush.msra.mxu0 %v958
        %1205 = vmatpush.msra.mxu0 %v954
        %1206 = vmatpush.msra.mxu0 %v950
        %1207 = vmatpush.msra.mxu0 %v946
        %1208 = vmatpush.msra.mxu0 %v942
        %1209 = vmatpush.msra.mxu0 %v938
        %1210 = vmatpush.msra.mxu0 %v934
        %1211 = vmatpush.msra.mxu0 %v930
        %1212 = vmatpush.msra.mxu0 %v926
        %1213 = vmatpush.msra.mxu0 %v922
        %1214 = vmatpush.msra.mxu0 %v918
        %1215 = vmatpush.msra.mxu0 %v914
        %1216 = vmatpush.msra.mxu0 %v910
        %1217 = vmatpush.msra.mxu0 %v906
        %1218 = vmatmul.f32.gmra.mxu0 %v774
        %v1219 = vpop.f32.mrf.mxu0
        %v1220 = vadd.f32 %v1200, %v1219
        %1221 = vdwg.mxu0
        %1222 = vmatpush.msra.mxu0 %v1030
        %1223 = vmatpush.msra.mxu0 %v1026
        %1224 = vmatpush.msra.mxu0 %v1022
        %1225 = vmatpush.msra.mxu0 %v1018
        %1226 = vmatpush.msra.mxu0 %v1014
        %1227 = vmatpush.msra.mxu0 %v1010
        %1228 = vmatpush.msra.mxu0 %v1006
        %1229 = vmatpush.msra.mxu0 %v1002
        %1230 = vmatpush.msra.mxu0 %v998
        %1231 = vmatpush.msra.mxu0 %v994
        %1232 = vmatpush.msra.mxu0 %v990
        %1233 = vmatpush.msra.mxu0 %v986
        %1234 = vmatpush.msra.mxu0 %v982
        %1235 = vmatpush.msra.mxu0 %v978
        %1236 = vmatpush.msra.mxu0 %v974
        %1237 = vmatpush.msra.mxu0 %v970
        %1238 = vmatmul.f32.gmra.mxu0 %v775
        %v1239 = vpop.f32.mrf.mxu0
        %v1240 = vadd.f32 %v1220, %v1239
        %1241 = vdwg.mxu0
        %1242 = vmatpush.msra.mxu0 %v1094
        %1243 = vmatpush.msra.mxu0 %v1090
        %1244 = vmatpush.msra.mxu0 %v1086
        %1245 = vmatpush.msra.mxu0 %v1082
        %1246 = vmatpush.msra.mxu0 %v1078
        %1247 = vmatpush.msra.mxu0 %v1074
        %1248 = vmatpush.msra.mxu0 %v1070
        %1249 = vmatpush.msra.mxu0 %v1066
        %1250 = vmatpush.msra.mxu0 %v1062
        %1251 = vmatpush.msra.mxu0 %v1058
        %1252 = vmatpush.msra.mxu0 %v1054
        %1253 = vmatpush.msra.mxu0 %v1050
        %1254 = vmatpush.msra.mxu0 %v1046
        %1255 = vmatpush.msra.mxu0 %v1042
        %1256 = vmatpush.msra.mxu0 %v1038
        %1257 = vmatpush.msra.mxu0 %v1034
        %1258 = vmatmul.f32.gmra.mxu0 %v776
        %v1259 = vpop.f32.mrf.mxu0
        %v1260 = vadd.f32 %v1240, %v1259
        %1261 = vdwg.mxu0
        %1262 = vmatpush.msra.mxu0 %v1158
        %1263 = vmatpush.msra.mxu0 %v1154
        %1264 = vmatpush.msra.mxu0 %v1150
        %1265 = vmatpush.msra.mxu0 %v1146
        %1266 = vmatpush.msra.mxu0 %v1142
        %1267 = vmatpush.msra.mxu0 %v1138
        %1268 = vmatpush.msra.mxu0 %v1134
        %1269 = vmatpush.msra.mxu0 %v1130
        %1270 = vmatpush.msra.mxu0 %v1126
        %1271 = vmatpush.msra.mxu0 %v1122
        %1272 = vmatpush.msra.mxu0 %v1118
        %1273 = vmatpush.msra.mxu0 %v1114
        %1274 = vmatpush.msra.mxu0 %v1110
        %1275 = vmatpush.msra.mxu0 %v1106
        %1276 = vmatpush.msra.mxu0 %v1102
        %1277 = vmatpush.msra.mxu0 %v1098
        %1278 = vmatmul.f32.gmra.mxu0 %v777
        %v1279 = vpop.f32.mrf.mxu0
        %v1280 = vadd.f32 %v1260, %v1279
        %1281 = vdwg.mxu0
        %1282 = vmatpush.msra.mxu0 %v839
        %1283 = vmatpush.msra.mxu0 %v835
        %1284 = vmatpush.msra.mxu0 %v831
        %1285 = vmatpush.msra.mxu0 %v827
        %1286 = vmatpush.msra.mxu0 %v823
        %1287 = vmatpush.msra.mxu0 %v819
        %1288 = vmatpush.msra.mxu0 %v815
        %1289 = vmatpush.msra.mxu0 %v811
        %1290 = vmatpush.msra.mxu0 %v807
        %1291 = vmatpush.msra.mxu0 %v803
        %1292 = vmatpush.msra.mxu0 %v799
        %1293 = vmatpush.msra.mxu0 %v795
        %1294 = vmatpush.msra.mxu0 %v791
        %1295 = vmatpush.msra.mxu0 %v787
        %1296 = vmatpush.msra.mxu0 %v783
        %1297 = vmatpush.msra.mxu0 %v779
        %1298 = vmatmul.f32.gmra.mxu0 %v772
        %v1299 = vpop.f32.mrf.mxu0
        %v1300 = vadd.f32 0.0, %v1299
        %1301 = vdwg.mxu0
        %1302 = vmatpush.msra.mxu0 %v903
        %1303 = vmatpush.msra.mxu0 %v899
        %1304 = vmatpush.msra.mxu0 %v895
        %1305 = vmatpush.msra.mxu0 %v891
        %1306 = vmatpush.msra.mxu0 %v887
        %1307 = vmatpush.msra.mxu0 %v883
        %1308 = vmatpush.msra.mxu0 %v879
        %1309 = vmatpush.msra.mxu0 %v875
        %1310 = vmatpush.msra.mxu0 %v871
        %1311 = vmatpush.msra.mxu0 %v867
        %1312 = vmatpush.msra.mxu0 %v863
        %1313 = vmatpush.msra.mxu0 %v859
        %1314 = vmatpush.msra.mxu0 %v855
        %1315 = vmatpush.msra.mxu0 %v851
        %1316 = vmatpush.msra.mxu0 %v847
        %1317 = vmatpush.msra.mxu0 %v843
        %1318 = vmatmul.f32.gmra.mxu0 %v773
        %v1319 = vpop.f32.mrf.mxu0
        %v1320 = vadd.f32 %v1300, %v1319
        %1321 = vdwg.mxu0
        %1322 = vmatpush.msra.mxu0 %v967
        %1323 = vmatpush.msra.mxu0 %v963
        %1324 = vmatpush.msra.mxu0 %v959
        %1325 = vmatpush.msra.mxu0 %v955
        %1326 = vmatpush.msra.mxu0 %v951
        %1327 = vmatpush.msra.mxu0 %v947
        %1328 = vmatpush.msra.mxu0 %v943
        %1329 = vmatpush.msra.mxu0 %v939
        %1330 = vmatpush.msra.mxu0 %v935
        %1331 = vmatpush.msra.mxu0 %v931
        %1332 = vmatpush.msra.mxu0 %v927
        %1333 = vmatpush.msra.mxu0 %v923
        %1334 = vmatpush.msra.mxu0 %v919
        %1335 = vmatpush.msra.mxu0 %v915
        %1336 = vmatpush.msra.mxu0 %v911
        %1337 = vmatpush.msra.mxu0 %v907
        %1338 = vmatmul.f32.gmra.mxu0 %v774
        %v1339 = vpop.f32.mrf.mxu0
        %v1340 = vadd.f32 %v1320, %v1339
        %1341 = vdwg.mxu0
        %1342 = vmatpush.msra.mxu0 %v1031
        %1343 = vmatpush.msra.mxu0 %v1027
        %1344 = vmatpush.msra.mxu0 %v1023
        %1345 = vmatpush.msra.mxu0 %v1019
        %1346 = vmatpush.msra.mxu0 %v1015
        %1347 = vmatpush.msra.mxu0 %v1011
        %1348 = vmatpush.msra.mxu0 %v1007
        %1349 = vmatpush.msra.mxu0 %v1003
        %1350 = vmatpush.msra.mxu0 %v999
        %1351 = vmatpush.msra.mxu0 %v995
        %1352 = vmatpush.msra.mxu0 %v991
        %1353 = vmatpush.msra.mxu0 %v987
        %1354 = vmatpush.msra.mxu0 %v983
        %1355 = vmatpush.msra.mxu0 %v979
        %1356 = vmatpush.msra.mxu0 %v975
        %1357 = vmatpush.msra.mxu0 %v971
        %1358 = vmatmul.f32.gmra.mxu0 %v775
        %v1359 = vpop.f32.mrf.mxu0
        %v1360 = vadd.f32 %v1340, %v1359
        %1361 = vdwg.mxu0
        %1362 = vmatpush.msra.mxu0 %v1095
        %1363 = vmatpush.msra.mxu0 %v1091
        %1364 = vmatpush.msra.mxu0 %v1087
        %1365 = vmatpush.msra.mxu0 %v1083
        %1366 = vmatpush.msra.mxu0 %v1079
        %1367 = vmatpush.msra.mxu0 %v1075
        %1368 = vmatpush.msra.mxu0 %v1071
        %1369 = vmatpush.msra.mxu0 %v1067
        %1370 = vmatpush.msra.mxu0 %v1063
        %1371 = vmatpush.msra.mxu0 %v1059
        %1372 = vmatpush.msra.mxu0 %v1055
        %1373 = vmatpush.msra.mxu0 %v1051
        %1374 = vmatpush.msra.mxu0 %v1047
        %1375 = vmatpush.msra.mxu0 %v1043
        %1376 = vmatpush.msra.mxu0 %v1039
        %1377 = vmatpush.msra.mxu0 %v1035
        %1378 = vmatmul.f32.gmra.mxu0 %v776
        %v1379 = vpop.f32.mrf.mxu0
        %v1380 = vadd.f32 %v1360, %v1379
        %1381 = vdwg.mxu0
        %1382 = vmatpush.msra.mxu0 %v1159
        %1383 = vmatpush.msra.mxu0 %v1155
        %1384 = vmatpush.msra.mxu0 %v1151
        %1385 = vmatpush.msra.mxu0 %v1147
        %1386 = vmatpush.msra.mxu0 %v1143
        %1387 = vmatpush.msra.mxu0 %v1139
        %1388 = vmatpush.msra.mxu0 %v1135
        %1389 = vmatpush.msra.mxu0 %v1131
        %1390 = vmatpush.msra.mxu0 %v1127
        %1391 = vmatpush.msra.mxu0 %v1123
        %1392 = vmatpush.msra.mxu0 %v1119
        %1393 = vmatpush.msra.mxu0 %v1115
        %1394 = vmatpush.msra.mxu0 %v1111
        %1395 = vmatpush.msra.mxu0 %v1107
        %1396 = vmatpush.msra.mxu0 %v1103
        %1397 = vmatpush.msra.mxu0 %v1099
        %1398 = vmatmul.f32.gmra.mxu0 %v777
        %v1399 = vpop.f32.mrf.mxu0
        %v1400 = vadd.f32 %v1380, %v1399
        %1401 = vdwg.mxu0
        %1402 = vmatpush.msra.mxu0 %v840
        %1403 = vmatpush.msra.mxu0 %v836
        %1404 = vmatpush.msra.mxu0 %v832
        %1405 = vmatpush.msra.mxu0 %v828
        %1406 = vmatpush.msra.mxu0 %v824
        %1407 = vmatpush.msra.mxu0 %v820
        %1408 = vmatpush.msra.mxu0 %v816
        %1409 = vmatpush.msra.mxu0 %v812
        %1410 = vmatpush.msra.mxu0 %v808
        %1411 = vmatpush.msra.mxu0 %v804
        %1412 = vmatpush.msra.mxu0 %v800
        %1413 = vmatpush.msra.mxu0 %v796
        %1414 = vmatpush.msra.mxu0 %v792
        %1415 = vmatpush.msra.mxu0 %v788
        %1416 = vmatpush.msra.mxu0 %v784
        %1417 = vmatpush.msra.mxu0 %v780
        %1418 = vmatmul.f32.gmra.mxu0 %v772
        %v1419 = vpop.f32.mrf.mxu0
        %v1420 = vadd.f32 0.0, %v1419
        %1421 = vdwg.mxu0
        %1422 = vmatpush.msra.mxu0 %v904
        %1423 = vmatpush.msra.mxu0 %v900
        %1424 = vmatpush.msra.mxu0 %v896
        %1425 = vmatpush.msra.mxu0 %v892
        %1426 = vmatpush.msra.mxu0 %v888
        %1427 = vmatpush.msra.mxu0 %v884
        %1428 = vmatpush.msra.mxu0 %v880
        %1429 = vmatpush.msra.mxu0 %v876
        %1430 = vmatpush.msra.mxu0 %v872
        %1431 = vmatpush.msra.mxu0 %v868
        %1432 = vmatpush.msra.mxu0 %v864
        %1433 = vmatpush.msra.mxu0 %v860
        %1434 = vmatpush.msra.mxu0 %v856
        %1435 = vmatpush.msra.mxu0 %v852
        %1436 = vmatpush.msra.mxu0 %v848
        %1437 = vmatpush.msra.mxu0 %v844
        %1438 = vmatmul.f32.gmra.mxu0 %v773
        %v1439 = vpop.f32.mrf.mxu0
        %v1440 = vadd.f32 %v1420, %v1439
        %1441 = vdwg.mxu0
        %1442 = vmatpush.msra.mxu0 %v968
        %1443 = vmatpush.msra.mxu0 %v964
        %1444 = vmatpush.msra.mxu0 %v960
        %1445 = vmatpush.msra.mxu0 %v956
        %1446 = vmatpush.msra.mxu0 %v952
        %1447 = vmatpush.msra.mxu0 %v948
        %1448 = vmatpush.msra.mxu0 %v944
        %1449 = vmatpush.msra.mxu0 %v940
        %1450 = vmatpush.msra.mxu0 %v936
        %1451 = vmatpush.msra.mxu0 %v932
        %1452 = vmatpush.msra.mxu0 %v928
        %1453 = vmatpush.msra.mxu0 %v924
        %1454 = vmatpush.msra.mxu0 %v920
        %1455 = vmatpush.msra.mxu0 %v916
        %1456 = vmatpush.msra.mxu0 %v912
        %1457 = vmatpush.msra.mxu0 %v908
        %1458 = vmatmul.f32.gmra.mxu0 %v774
        %v1459 = vpop.f32.mrf.mxu0
        %v1460 = vadd.f32 %v1440, %v1459
        %1461 = vdwg.mxu0
        %1462 = vmatpush.msra.mxu0 %v1032
        %1463 = vmatpush.msra.mxu0 %v1028
        %1464 = vmatpush.msra.mxu0 %v1024
        %1465 = vmatpush.msra.mxu0 %v1020
        %1466 = vmatpush.msra.mxu0 %v1016
        %1467 = vmatpush.msra.mxu0 %v1012
        %1468 = vmatpush.msra.mxu0 %v1008
        %1469 = vmatpush.msra.mxu0 %v1004
        %1470 = vmatpush.msra.mxu0 %v1000
        %1471 = vmatpush.msra.mxu0 %v996
        %1472 = vmatpush.msra.mxu0 %v992
        %1473 = vmatpush.msra.mxu0 %v988
        %1474 = vmatpush.msra.mxu0 %v984
        %1475 = vmatpush.msra.mxu0 %v980
        %1476 = vmatpush.msra.mxu0 %v976
        %1477 = vmatpush.msra.mxu0 %v972
        %1478 = vmatmul.f32.gmra.mxu0 %v775
        %v1479 = vpop.f32.mrf.mxu0
        %v1480 = vadd.f32 %v1460, %v1479
        %1481 = vdwg.mxu0
        %1482 = vmatpush.msra.mxu0 %v1096
        %1483 = vmatpush.msra.mxu0 %v1092
        %1484 = vmatpush.msra.mxu0 %v1088
        %1485 = vmatpush.msra.mxu0 %v1084
        %1486 = vmatpush.msra.mxu0 %v1080
        %1487 = vmatpush.msra.mxu0 %v1076
        %1488 = vmatpush.msra.mxu0 %v1072
        %1489 = vmatpush.msra.mxu0 %v1068
        %1490 = vmatpush.msra.mxu0 %v1064
        %1491 = vmatpush.msra.mxu0 %v1060
        %1492 = vmatpush.msra.mxu0 %v1056
        %1493 = vmatpush.msra.mxu0 %v1052
        %1494 = vmatpush.msra.mxu0 %v1048
        %1495 = vmatpush.msra.mxu0 %v1044
        %1496 = vmatpush.msra.mxu0 %v1040
        %1497 = vmatpush.msra.mxu0 %v1036
        %1498 = vmatmul.f32.gmra.mxu0 %v776
        %v1499 = vpop.f32.mrf.mxu0
        %v1500 = vadd.f32 %v1480, %v1499
        %1501 = vdwg.mxu0
        %1502 = vmatpush.msra.mxu0 %v1160
        %1503 = vmatpush.msra.mxu0 %v1156
        %1504 = vmatpush.msra.mxu0 %v1152
        %1505 = vmatpush.msra.mxu0 %v1148
        %1506 = vmatpush.msra.mxu0 %v1144
        %1507 = vmatpush.msra.mxu0 %v1140
        %1508 = vmatpush.msra.mxu0 %v1136
        %1509 = vmatpush.msra.mxu0 %v1132
        %1510 = vmatpush.msra.mxu0 %v1128
        %1511 = vmatpush.msra.mxu0 %v1124
        %1512 = vmatpush.msra.mxu0 %v1120
        %1513 = vmatpush.msra.mxu0 %v1116
        %1514 = vmatpush.msra.mxu0 %v1112
        %1515 = vmatpush.msra.mxu0 %v1108
        %1516 = vmatpush.msra.mxu0 %v1104
        %1517 = vmatpush.msra.mxu0 %v1100
        %1518 = vmatmul.f32.gmra.mxu0 %v777
        %v1519 = vpop.f32.mrf.mxu0
        %v1520 = vadd.f32 %v1500, %v1519
        %1521 = vdwg.mxu0
        %1522 = vmatpush.msra.mxu0 %v841
        %1523 = vmatpush.msra.mxu0 %v837
        %1524 = vmatpush.msra.mxu0 %v833
        %1525 = vmatpush.msra.mxu0 %v829
        %1526 = vmatpush.msra.mxu0 %v825
        %1527 = vmatpush.msra.mxu0 %v821
        %1528 = vmatpush.msra.mxu0 %v817
        %1529 = vmatpush.msra.mxu0 %v813
        %1530 = vmatpush.msra.mxu0 %v809
        %1531 = vmatpush.msra.mxu0 %v805
        %1532 = vmatpush.msra.mxu0 %v801
        %1533 = vmatpush.msra.mxu0 %v797
        %1534 = vmatpush.msra.mxu0 %v793
        %1535 = vmatpush.msra.mxu0 %v789
        %1536 = vmatpush.msra.mxu0 %v785
        %1537 = vmatpush.msra.mxu0 %v781
        %1538 = vmatmul.f32.gmra.mxu0 %v772
        %v1539 = vpop.f32.mrf.mxu0
        %v1540 = vadd.f32 0.0, %v1539
        %1541 = vdwg.mxu0
        %1542 = vmatpush.msra.mxu0 %v905
        %1543 = vmatpush.msra.mxu0 %v901
        %1544 = vmatpush.msra.mxu0 %v897
        %1545 = vmatpush.msra.mxu0 %v893
        %1546 = vmatpush.msra.mxu0 %v889
        %1547 = vmatpush.msra.mxu0 %v885
        %1548 = vmatpush.msra.mxu0 %v881
        %1549 = vmatpush.msra.mxu0 %v877
        %1550 = vmatpush.msra.mxu0 %v873
        %1551 = vmatpush.msra.mxu0 %v869
        %1552 = vmatpush.msra.mxu0 %v865
        %1553 = vmatpush.msra.mxu0 %v861
        %1554 = vmatpush.msra.mxu0 %v857
        %1555 = vmatpush.msra.mxu0 %v853
        %1556 = vmatpush.msra.mxu0 %v849
        %1557 = vmatpush.msra.mxu0 %v845
        %1558 = vmatmul.f32.gmra.mxu0 %v773
        %v1559 = vpop.f32.mrf.mxu0
        %v1560 = vadd.f32 %v1540, %v1559
        %1561 = vdwg.mxu0
        %1562 = vmatpush.msra.mxu0 %v969
        %1563 = vmatpush.msra.mxu0 %v965
        %1564 = vmatpush.msra.mxu0 %v961
        %1565 = vmatpush.msra.mxu0 %v957
        %1566 = vmatpush.msra.mxu0 %v953
        %1567 = vmatpush.msra.mxu0 %v949
        %1568 = vmatpush.msra.mxu0 %v945
        %1569 = vmatpush.msra.mxu0 %v941
        %1570 = vmatpush.msra.mxu0 %v937
        %1571 = vmatpush.msra.mxu0 %v933
        %1572 = vmatpush.msra.mxu0 %v929
        %1573 = vmatpush.msra.mxu0 %v925
        %1574 = vmatpush.msra.mxu0 %v921
        %1575 = vmatpush.msra.mxu0 %v917
        %1576 = vmatpush.msra.mxu0 %v913
        %1577 = vmatpush.msra.mxu0 %v909
        %1578 = vmatmul.f32.gmra.mxu0 %v774
        %v1579 = vpop.f32.mrf.mxu0
        %v1580 = vadd.f32 %v1560, %v1579
        %1581 = vdwg.mxu0
        %1582 = vmatpush.msra.mxu0 %v1033
        %1583 = vmatpush.msra.mxu0 %v1029
        %1584 = vmatpush.msra.mxu0 %v1025
        %1585 = vmatpush.msra.mxu0 %v1021
        %1586 = vmatpush.msra.mxu0 %v1017
        %1587 = vmatpush.msra.mxu0 %v1013
        %1588 = vmatpush.msra.mxu0 %v1009
        %1589 = vmatpush.msra.mxu0 %v1005
        %1590 = vmatpush.msra.mxu0 %v1001
        %1591 = vmatpush.msra.mxu0 %v997
        %1592 = vmatpush.msra.mxu0 %v993
        %1593 = vmatpush.msra.mxu0 %v989
        %1594 = vmatpush.msra.mxu0 %v985
        %1595 = vmatpush.msra.mxu0 %v981
        %1596 = vmatpush.msra.mxu0 %v977
        %1597 = vmatpush.msra.mxu0 %v973
        %1598 = vmatmul.f32.gmra.mxu0 %v775
        %v1599 = vpop.f32.mrf.mxu0
        %v1600 = vadd.f32 %v1580, %v1599
        %1601 = vdwg.mxu0
        %1602 = vmatpush.msra.mxu0 %v1097
        %1603 = vmatpush.msra.mxu0 %v1093
        %1604 = vmatpush.msra.mxu0 %v1089
        %1605 = vmatpush.msra.mxu0 %v1085
        %1606 = vmatpush.msra.mxu0 %v1081
        %1607 = vmatpush.msra.mxu0 %v1077
        %1608 = vmatpush.msra.mxu0 %v1073
        %1609 = vmatpush.msra.mxu0 %v1069
        %1610 = vmatpush.msra.mxu0 %v1065
        %1611 = vmatpush.msra.mxu0 %v1061
        %1612 = vmatpush.msra.mxu0 %v1057
        %1613 = vmatpush.msra.mxu0 %v1053
        %1614 = vmatpush.msra.mxu0 %v1049
        %1615 = vmatpush.msra.mxu0 %v1045
        %1616 = vmatpush.msra.mxu0 %v1041
        %1617 = vmatpush.msra.mxu0 %v1037
        %1618 = vmatmul.f32.gmra.mxu0 %v776
        %v1619 = vpop.f32.mrf.mxu0
        %v1620 = vadd.f32 %v1600, %v1619
        %1621 = vdwg.mxu0
        %1622 = vmatpush.msra.mxu0 %v1161
        %1623 = vmatpush.msra.mxu0 %v1157
        %1624 = vmatpush.msra.mxu0 %v1153
        %1625 = vmatpush.msra.mxu0 %v1149
        %1626 = vmatpush.msra.mxu0 %v1145
        %1627 = vmatpush.msra.mxu0 %v1141
        %1628 = vmatpush.msra.mxu0 %v1137
        %1629 = vmatpush.msra.mxu0 %v1133
        %1630 = vmatpush.msra.mxu0 %v1129
        %1631 = vmatpush.msra.mxu0 %v1125
        %1632 = vmatpush.msra.mxu0 %v1121
        %1633 = vmatpush.msra.mxu0 %v1117
        %1634 = vmatpush.msra.mxu0 %v1113
        %1635 = vmatpush.msra.mxu0 %v1109
        %1636 = vmatpush.msra.mxu0 %v1105
        %1637 = vmatpush.msra.mxu0 %v1101
        %1638 = vmatmul.f32.gmra.mxu0 %v777
        %v1639 = vpop.f32.mrf.mxu0
        %v1640 = vadd.f32 %v1620, %v1639
        %1641 = vdwg.mxu0
        %v1642 = vmax.f32 %v1280, %v1400
        %v1643 = vmax.f32 %v1520, %v1640
        %v1644 = vmax.f32 %v1642, %v1643
        %v1645 = vld [vmem:[%s5] sm:$0x1]
        %v1647 = vperm.slane %v1645, 0
        %v1649 = vadd.f32 %v1644, %v1647
        %v1650 = vmax.f32 %v1649, 0.0
        %v1652 = vrot.slane %v1650, 1
        %v1654 = vrot.slane %v1650, 2
        %v1656 = vrot.slane %v1650, 3
        %v1658 = vld [vmem:[%s417] sm:$0x7f]
        %v1659 = vld [vmem:[%s6] sm:$0xff]
        %v1660 = vld [vmem:[%s6 + $0x8] sm:$0xff]
        %v1661 = vld [vmem:[%s6 + $0x10] sm:$0xff]
        %v1662 = vld [vmem:[%s6 + $0x18] sm:$0xff]
        %v1663 = vld [vmem:[%s6 + $0x20] sm:$0xff]
        %v1664 = vld [vmem:[%s6 + $0x28] sm:$0xff]
        %v1665 = vld [vmem:[%s6 + $0x30] sm:$0xff]
        %v1666 = vld [vmem:[%s6 + $0x38] sm:$0xff]
        %v1667 = vld [vmem:[%s6 + $0x40] sm:$0xff]
        %v1668 = vld [vmem:[%s6 + $0x48] sm:$0xff]
        %v1669 = vld [vmem:[%s6 + $0x50] sm:$0xff]
        %v1670 = vld [vmem:[%s6 + $0x58] sm:$0xff]
        %v1671 = vld [vmem:[%s6 + $0x60] sm:$0xff]
        %v1672 = vld [vmem:[%s6 + $0x68] sm:$0xff]
        %v1673 = vld [vmem:[%s6 + $0x70] sm:$0xff]
        %v1674 = vld [vmem:[%s6 + $0x78] sm:$0xff]
        %v1675 = vld [vmem:[%s6 + $0x80] sm:$0xff]
        %v1676 = vld [vmem:[%s6 + $0x88] sm:$0xff]
        %v1677 = vld [vmem:[%s6 + $0x90] sm:$0xff]
        %v1678 = vld [vmem:[%s6 + $0x98] sm:$0xff]
        %v1679 = vld [vmem:[%s6 + $0xa0] sm:$0xff]
        %v1680 = vld [vmem:[%s6 + $0xa8] sm:$0xff]
        %v1681 = vld [vmem:[%s6 + $0xb0] sm:$0xff]
        %v1682 = vld [vmem:[%s6 + $0xb8] sm:$0xff]
        %v1683 = vld [vmem:[%s6 + $0xc0] sm:$0xff]
        %v1684 = vld [vmem:[%s6 + $0xc8] sm:$0xff]
        %v1685 = vld [vmem:[%s6 + $0xd0] sm:$0xff]
        %v1686 = vld [vmem:[%s6 + $0xd8] sm:$0xff]
        %v1687 = vld [vmem:[%s6 + $0xe0] sm:$0xff]
        %v1688 = vld [vmem:[%s6 + $0xe8] sm:$0xff]
        %v1689 = vld [vmem:[%s6 + $0xf0] sm:$0xff]
        %v1690 = vld [vmem:[%s6 + $0xf8] sm:$0xff]
        %v1691 = vld [vmem:[%s6 + $0x100] sm:$0xff]
        %v1692 = vld [vmem:[%s6 + $0x108] sm:$0xff]
        %v1693 = vld [vmem:[%s6 + $0x110] sm:$0xff]
        %v1694 = vld [vmem:[%s6 + $0x118] sm:$0xff]
        %v1695 = vld [vmem:[%s6 + $0x120] sm:$0xff]
        %v1696 = vld [vmem:[%s6 + $0x128] sm:$0xff]
        %v1697 = vld [vmem:[%s6 + $0x130] sm:$0xff]
        %v1698 = vld [vmem:[%s6 + $0x138] sm:$0xff]
        %v1699 = vld [vmem:[%s6 + $0x140] sm:$0xff]
        %v1700 = vld [vmem:[%s6 + $0x148] sm:$0xff]
        %v1701 = vld [vmem:[%s6 + $0x150] sm:$0xff]
        %v1702 = vld [vmem:[%s6 + $0x158] sm:$0xff]
        %v1703 = vld [vmem:[%s6 + $0x160] sm:$0xff]
        %v1704 = vld [vmem:[%s6 + $0x168] sm:$0xff]
        %v1705 = vld [vmem:[%s6 + $0x170] sm:$0xff]
        %v1706 = vld [vmem:[%s6 + $0x178] sm:$0xff]
        %v1707 = vld [vmem:[%s6 + $0x180] sm:$0xff]
        %v1708 = vld [vmem:[%s6 + $0x188] sm:$0xff]
        %v1709 = vld [vmem:[%s6 + $0x190] sm:$0xff]
        %v1710 = vld [vmem:[%s6 + $0x198] sm:$0xff]
        %v1711 = vld [vmem:[%s6 + $0x1a0] sm:$0xff]
        %v1712 = vld [vmem:[%s6 + $0x1a8] sm:$0xff]
        %v1713 = vld [vmem:[%s6 + $0x1b0] sm:$0xff]
        %v1714 = vld [vmem:[%s6 + $0x1b8] sm:$0xff]
        %v1715 = vld [vmem:[%s6 + $0x1c0] sm:$0xff]
        %v1716 = vld [vmem:[%s6 + $0x1c8] sm:$0xff]
        %v1717 = vld [vmem:[%s6 + $0x1d0] sm:$0xff]
        %v1718 = vld [vmem:[%s6 + $0x1d8] sm:$0xff]
        %v1719 = vld [vmem:[%s6 + $0x1e0] sm:$0xff]
        %v1720 = vld [vmem:[%s6 + $0x1e8] sm:$0xff]
        %v1721 = vld [vmem:[%s6 + $0x1f0] sm:$0xff]
        %v1722 = vld [vmem:[%s6 + $0x1f8] sm:$0xff]
        %v1723 = vld [vmem:[%s6 + $0x200] sm:$0xff]
        %v1724 = vld [vmem:[%s6 + $0x208] sm:$0xff]
        %v1725 = vld [vmem:[%s6 + $0x210] sm:$0xff]
        %v1726 = vld [vmem:[%s6 + $0x218] sm:$0xff]
        %v1727 = vld [vmem:[%s6 + $0x220] sm:$0xff]
        %v1728 = vld [vmem:[%s6 + $0x228] sm:$0xff]
        %v1729 = vld [vmem:[%s6 + $0x230] sm:$0xff]
        %v1730 = vld [vmem:[%s6 + $0x238] sm:$0xff]
        %v1731 = vld [vmem:[%s6 + $0x240] sm:$0xff]
        %v1732 = vld [vmem:[%s6 + $0x248] sm:$0xff]
        %v1733 = vld [vmem:[%s6 + $0x250] sm:$0xff]
        %v1734 = vld [vmem:[%s6 + $0x258] sm:$0xff]
        %v1735 = vld [vmem:[%s6 + $0x260] sm:$0xff]
        %v1736 = vld [vmem:[%s6 + $0x268] sm:$0xff]
        %v1737 = vld [vmem:[%s6 + $0x270] sm:$0xff]
        %v1738 = vld [vmem:[%s6 + $0x278] sm:$0xff]
        %v1739 = vld [vmem:[%s6 + $0x280] sm:$0xff]
        %v1740 = vld [vmem:[%s6 + $0x288] sm:$0xff]
        %v1741 = vld [vmem:[%s6 + $0x290] sm:$0xff]
        %v1742 = vld [vmem:[%s6 + $0x298] sm:$0xff]
        %v1743 = vld [vmem:[%s6 + $0x2a0] sm:$0xff]
        %v1744 = vld [vmem:[%s6 + $0x2a8] sm:$0xff]
        %v1745 = vld [vmem:[%s6 + $0x2b0] sm:$0xff]
        %v1746 = vld [vmem:[%s6 + $0x2b8] sm:$0xff]
        %v1747 = vld [vmem:[%s6 + $0x2c0] sm:$0xff]
        %v1748 = vld [vmem:[%s6 + $0x2c8] sm:$0xff]
        %v1749 = vld [vmem:[%s6 + $0x2d0] sm:$0xff]
        %v1750 = vld [vmem:[%s6 + $0x2d8] sm:$0xff]
        %v1751 = vld [vmem:[%s6 + $0x2e0] sm:$0xff]
        %v1752 = vld [vmem:[%s6 + $0x2e8] sm:$0xff]
        %v1753 = vld [vmem:[%s6 + $0x2f0] sm:$0xff]
        %v1754 = vld [vmem:[%s6 + $0x2f8] sm:$0xff]
        %v1755 = vld [vmem:[%s6 + $0x300] sm:$0xff]
        %v1756 = vld [vmem:[%s6 + $0x308] sm:$0xff]
        %v1757 = vld [vmem:[%s7] sm:$0xff]
        %v1758 = vld [vmem:[%s7 + $0x8] sm:$0xff]
        %v1759 = vld [vmem:[%s7 + $0x10] sm:$0xff]
        %v1760 = vld [vmem:[%s7 + $0x18] sm:$0xff]
        %v1761 = vld [vmem:[%s7 + $0x20] sm:$0xff]
        %v1762 = vld [vmem:[%s7 + $0x28] sm:$0xff]
        %v1763 = vld [vmem:[%s7 + $0x30] sm:$0xff]
        %v1764 = vld [vmem:[%s7 + $0x38] sm:$0xff]
        %v1765 = vld [vmem:[%s7 + $0x40] sm:$0xff]
        %v1766 = vld [vmem:[%s7 + $0x48] sm:$0xff]
        %v1767 = vld [vmem:[%s7 + $0x50] sm:$0xff]
        %v1768 = vld [vmem:[%s7 + $0x58] sm:$0xff]
        %v1769 = vld [vmem:[%s7 + $0x60] sm:$0xff]
        %v1770 = vld [vmem:[%s7 + $0x68] sm:$0xff]
        %v1771 = vld [vmem:[%s7 + $0x70] sm:$0xff]
        %v1772 = vld [vmem:[%s7 + $0x78] sm:$0xff]
        %v1773 = vld [vmem:[%s7 + $0x80] sm:$0xff]
        %v1774 = vld [vmem:[%s7 + $0x88] sm:$0xff]
        %v1775 = vld [vmem:[%s7 + $0x90] sm:$0xff]
        %v1776 = vld [vmem:[%s7 + $0x98] sm:$0xff]
        %v1777 = vld [vmem:[%s7 + $0xa0] sm:$0xff]
        %v1778 = vld [vmem:[%s7 + $0xa8] sm:$0xff]
        %v1779 = vld [vmem:[%s7 + $0xb0] sm:$0xff]
        %v1780 = vld [vmem:[%s7 + $0xb8] sm:$0xff]
        %v1781 = vld [vmem:[%s7 + $0xc0] sm:$0xff]
        %v1782 = vld [vmem:[%s7 + $0xc8] sm:$0xff]
        %v1783 = vld [vmem:[%s7 + $0xd0] sm:$0xff]
        %v1784 = vld [vmem:[%s7 + $0xd8] sm:$0xff]
        %v1785 = vld [vmem:[%s7 + $0xe0] sm:$0xff]
        %v1786 = vld [vmem:[%s7 + $0xe8] sm:$0xff]
        %v1787 = vld [vmem:[%s7 + $0xf0] sm:$0xff]
        %v1788 = vld [vmem:[%s7 + $0xf8] sm:$0xff]
        %v1789 = vld [vmem:[%s7 + $0x100] sm:$0xff]
        %v1790 = vld [vmem:[%s7 + $0x108] sm:$0xff]
        %v1791 = vld [vmem:[%s7 + $0x110] sm:$0xff]
        %v1792 = vld [vmem:[%s7 + $0x118] sm:$0xff]
        %v1793 = vld [vmem:[%s7 + $0x120] sm:$0xff]
        %v1794 = vld [vmem:[%s7 + $0x128] sm:$0xff]
        %v1795 = vld [vmem:[%s7 + $0x130] sm:$0xff]
        %v1796 = vld [vmem:[%s7 + $0x138] sm:$0xff]
        %v1797 = vld [vmem:[%s7 + $0x140] sm:$0xff]
        %v1798 = vld [vmem:[%s7 + $0x148] sm:$0xff]
        %v1799 = vld [vmem:[%s7 + $0x150] sm:$0xff]
        %v1800 = vld [vmem:[%s7 + $0x158] sm:$0xff]
        %v1801 = vld [vmem:[%s7 + $0x160] sm:$0xff]
        %v1802 = vld [vmem:[%s7 + $0x168] sm:$0xff]
        %v1803 = vld [vmem:[%s7 + $0x170] sm:$0xff]
        %v1804 = vld [vmem:[%s7 + $0x178] sm:$0xff]
        %v1805 = vld [vmem:[%s7 + $0x180] sm:$0xff]
        %v1806 = vld [vmem:[%s7 + $0x188] sm:$0xff]
        %v1807 = vld [vmem:[%s7 + $0x190] sm:$0xff]
        %v1808 = vld [vmem:[%s7 + $0x198] sm:$0xff]
        %v1809 = vld [vmem:[%s7 + $0x1a0] sm:$0xff]
        %v1810 = vld [vmem:[%s7 + $0x1a8] sm:$0xff]
        %v1811 = vld [vmem:[%s7 + $0x1b0] sm:$0xff]
        %v1812 = vld [vmem:[%s7 + $0x1b8] sm:$0xff]
        %v1813 = vld [vmem:[%s7 + $0x1c0] sm:$0xff]
        %v1814 = vld [vmem:[%s7 + $0x1c8] sm:$0xff]
        %v1815 = vld [vmem:[%s7 + $0x1d0] sm:$0xff]
        %v1816 = vld [vmem:[%s7 + $0x1d8] sm:$0xff]
        %v1817 = vld [vmem:[%s7 + $0x1e0] sm:$0xff]
        %v1818 = vld [vmem:[%s7 + $0x1e8] sm:$0xff]
        %v1819 = vld [vmem:[%s7 + $0x1f0] sm:$0xff]
        %v1820 = vld [vmem:[%s7 + $0x1f8] sm:$0xff]
        %1821 = vmatpush.msra.mxu0 %v1772
        %1822 = vmatpush.msra.mxu0 %v1771
        %1823 = vmatpush.msra.mxu0 %v1770
        %1824 = vmatpush.msra.mxu0 %v1769
        %1825 = vmatpush.msra.mxu0 %v1768
        %1826 = vmatpush.msra.mxu0 %v1767
        %1827 = vmatpush.msra.mxu0 %v1766
        %1828 = vmatpush.msra.mxu0 %v1765
        %1829 = vmatpush.msra.mxu0 %v1764
        %1830 = vmatpush.msra.mxu0 %v1763
        %1831 = vmatpush.msra.mxu0 %v1762
        %1832 = vmatpush.msra.mxu0 %v1761
        %1833 = vmatpush.msra.mxu0 %v1760
        %1834 = vmatpush.msra.mxu0 %v1759
        %1835 = vmatpush.msra.mxu0 %v1758
        %1836 = vmatpush.msra.mxu0 %v1757
        %1837 = vmatmul.f32.gmra.mxu0 %v1650
        %v1838 = vpop.f32.mrf.mxu0
        %v1839 = vadd.f32 0.0, %v1838
        %1840 = vdwg.mxu0
        %1841 = vmatpush.msra.mxu0 %v1788
        %1842 = vmatpush.msra.mxu0 %v1787
        %1843 = vmatpush.msra.mxu0 %v1786
        %1844 = vmatpush.msra.mxu0 %v1785
        %1845 = vmatpush.msra.mxu0 %v1784
        %1846 = vmatpush.msra.mxu0 %v1783
        %1847 = vmatpush.msra.mxu0 %v1782
        %1848 = vmatpush.msra.mxu0 %v1781
        %1849 = vmatpush.msra.mxu0 %v1780
        %1850 = vmatpush.msra.mxu0 %v1779
        %1851 = vmatpush.msra.mxu0 %v1778
        %1852 = vmatpush.msra.mxu0 %v1777
        %1853 = vmatpush.msra.mxu0 %v1776
        %1854 = vmatpush.msra.mxu0 %v1775
        %1855 = vmatpush.msra.mxu0 %v1774
        %1856 = vmatpush.msra.mxu0 %v1773
        %1857 = vmatmul.f32.gmra.mxu0 %v1652
        %v1858 = vpop.f32.mrf.mxu0
        %v1859 = vadd.f32 %v1839, %v1858
        %1860 = vdwg.mxu0
        %1861 = vmatpush.msra.mxu0 %v1804
        %1862 = vmatpush.msra.mxu0 %v1803
        %1863 = vmatpush.msra.mxu0 %v1802
        %1864 = vmatpush.msra.mxu0 %v1801
        %1865 = vmatpush.msra.mxu0 %v1800
        %1866 = vmatpush.msra.mxu0 %v1799
        %1867 = vmatpush.msra.mxu0 %v1798
        %1868 = vmatpush.msra.mxu0 %v1797
        %1869 = vmatpush.msra.mxu0 %v1796
        %1870 = vmatpush.msra.mxu0 %v1795
        %1871 = vmatpush.msra.mxu0 %v1794
        %1872 = vmatpush.msra.mxu0 %v1793
        %1873 = vmatpush.msra.mxu0 %v1792
        %1874 = vmatpush.msra.mxu0 %v1791
        %1875 = vmatpush.msra.mxu0 %v1790
        %1876 = vmatpush.msra.mxu0 %v1789
        %1877 = vmatmul.f32.gmra.mxu0 %v1654
        %v1878 = vpop.f32.mrf.mxu0
        %v1879 = vadd.f32 %v1859, %v1878
        %1880 = vdwg.mxu0
        %1881 = vmatpush.msra.mxu0 %v1820
        %1882 = vmatpush.msra.mxu0 %v1819
        %1883 = vmatpush.msra.mxu0 %v1818
        %1884 = vmatpush.msra.mxu0 %v1817
        %1885 = vmatpush.msra.mxu0 %v1816
        %1886 = vmatpush.msra.mxu0 %v1815
        %1887 = vmatpush.msra.mxu0 %v1814
        %1888 = vmatpush.msra.mxu0 %v1813
        %1889 = vmatpush.msra.mxu0 %v1812
        %1890 = vmatpush.msra.mxu0 %v1811
        %1891 = vmatpush.msra.mxu0 %v1810
        %1892 = vmatpush.msra.mxu0 %v1809
        %1893 = vmatpush.msra.mxu0 %v1808
        %1894 = vmatpush.msra.mxu0 %v1807
        %1895 = vmatpush.msra.mxu0 %v1806
        %1896 = vmatpush.msra.mxu0 %v1805
        %1897 = vmatmul.f32.gmra.mxu0 %v1656
        %v1898 = vpop.f32.mrf.mxu0
        %v1899 = vadd.f32 %v1879, %v1898
        %1900 = vdwg.mxu0
        %v1902 = vperm.slane %v1658, 0
        %v1903 = vperm.slane %v1658, 1
        %v1904 = vperm.slane %v1658, 2
        %v1905 = vperm.slane %v1658, 3
        %v1906 = vperm.slane %v1658, 4
        %v1907 = vperm.slane %v1658, 5
        %v1908 = vperm.slane %v1658, 6
        %vm1915 = vcmask 130048
        %v1916 = vsel %vm1915, %v1908, 0
        %1918 = vmatpush.msra.mxu0 %v1674
        %1919 = vmatpush.msra.mxu0 %v1673
        %1920 = vmatpush.msra.mxu0 %v1672
        %1921 = vmatpush.msra.mxu0 %v1671
        %1922 = vmatpush.msra.mxu0 %v1670
        %1923 = vmatpush.msra.mxu0 %v1669
        %1924 = vmatpush.msra.mxu0 %v1668
        %1925 = vmatpush.msra.mxu0 %v1667
        %1926 = vmatpush.msra.mxu0 %v1666
        %1927 = vmatpush.msra.mxu0 %v1665
        %1928 = vmatpush.msra.mxu0 %v1664
        %1929 = vmatpush.msra.mxu0 %v1663
        %1930 = vmatpush.msra.mxu0 %v1662
        %1931 = vmatpush.msra.mxu0 %v1661
        %1932 = vmatpush.msra.mxu0 %v1660
        %1933 = vmatpush.msra.mxu0 %v1659
        %1934 = vmatmul.f32.gmra.mxu0 %v1902
        %v1935 = vpop.f32.mrf.mxu0
        %v1936 = vadd.f32 %v1899, %v1935
        %1937 = vdwg.mxu0
        %1938 = vmatpush.msra.mxu0 %v1690
        %1939 = vmatpush.msra.mxu0 %v1689
        %1940 = vmatpush.msra.mxu0 %v1688
        %1941 = vmatpush.msra.mxu0 %v1687
        %1942 = vmatpush.msra.mxu0 %v1686
        %1943 = vmatpush.msra.mxu0 %v1685
        %1944 = vmatpush.msra.mxu0 %v1684
        %1945 = vmatpush.msra.mxu0 %v1683
        %1946 = vmatpush.msra.mxu0 %v1682
        %1947 = vmatpush.msra.mxu0 %v1681
        %1948 = vmatpush.msra.mxu0 %v1680
        %1949 = vmatpush.msra.mxu0 %v1679
        %1950 = vmatpush.msra.mxu0 %v1678
        %1951 = vmatpush.msra.mxu0 %v1677
        %1952 = vmatpush.msra.mxu0 %v1676
        %1953 = vmatpush.msra.mxu0 %v1675
        %1954 = vmatmul.f32.gmra.mxu0 %v1903
        %v1955 = vpop.f32.mrf.mxu0
        %v1956 = vadd.f32 %v1936, %v1955
        %1957 = vdwg.mxu0
        %1958 = vmatpush.msra.mxu0 %v1706
        %1959 = vmatpush.msra.mxu0 %v1705
        %1960 = vmatpush.msra.mxu0 %v1704
        %1961 = vmatpush.msra.mxu0 %v1703
        %1962 = vmatpush.msra.mxu0 %v1702
        %1963 = vmatpush.msra.mxu0 %v1701
        %1964 = vmatpush.msra.mxu0 %v1700
        %1965 = vmatpush.msra.mxu0 %v1699
        %1966 = vmatpush.msra.mxu0 %v1698
        %1967 = vmatpush.msra.mxu0 %v1697
        %1968 = vmatpush.msra.mxu0 %v1696
        %1969 = vmatpush.msra.mxu0 %v1695
        %1970 = vmatpush.msra.mxu0 %v1694
        %1971 = vmatpush.msra.mxu0 %v1693
        %1972 = vmatpush.msra.mxu0 %v1692
        %1973 = vmatpush.msra.mxu0 %v1691
        %1974 = vmatmul.f32.gmra.mxu0 %v1904
        %v1975 = vpop.f32.mrf.mxu0
        %v1976 = vadd.f32 %v1956, %v1975
        %1977 = vdwg.mxu0
        %1978 = vmatpush.msra.mxu0 %v1722
        %1979 = vmatpush.msra.mxu0 %v1721
        %1980 = vmatpush.msra.mxu0 %v1720
        %1981 = vmatpush.msra.mxu0 %v1719
        %1982 = vmatpush.msra.mxu0 %v1718
        %1983 = vmatpush.msra.mxu0 %v1717
        %1984 = vmatpush.msra.mxu0 %v1716
        %1985 = vmatpush.msra.mxu0 %v1715
        %1986 = vmatpush.msra.mxu0 %v1714
        %1987 = vmatpush.msra.mxu0 %v1713
        %1988 = vmatpush.msra.mxu0 %v1712
        %1989 = vmatpush.msra.mxu0 %v1711
        %1990 = vmatpush.msra.mxu0 %v1710
        %1991 = vmatpush.msra.mxu0 %v1709
        %1992 = vmatpush.msra.mxu0 %v1708
        %1993 = vmatpush.msra.mxu0 %v1707
        %1994 = vmatmul.f32.gmra.mxu0 %v1905
        %v1995 = vpop.f32.mrf.mxu0
        %v1996 = vadd.f32 %v1976, %v1995
        %1997 = vdwg.mxu0
        %1998 = vmatpush.msra.mxu0 %v1738
        %1999 = vmatpush.msra.mxu0 %v1737
        %2000 = vmatpush.msra.mxu0 %v1736
        %2001 = vmatpush.msra.mxu0 %v1735
        %2002 = vmatpush.msra.mxu0 %v1734
        %2003 = vmatpush.msra.mxu0 %v1733
        %2004 = vmatpush.msra.mxu0 %v1732
        %2005 = vmatpush.msra.mxu0 %v1731
        %2006 = vmatpush.msra.mxu0 %v1730
        %2007 = vmatpush.msra.mxu0 %v1729
        %2008 = vmatpush.msra.mxu0 %v1728
        %2009 = vmatpush.msra.mxu0 %v1727
        %2010 = vmatpush.msra.mxu0 %v1726
        %2011 = vmatpush.msra.mxu0 %v1725
        %2012 = vmatpush.msra.mxu0 %v1724
        %2013 = vmatpush.msra.mxu0 %v1723
        %2014 = vmatmul.f32.gmra.mxu0 %v1906
        %v2015 = vpop.f32.mrf.mxu0
        %v2016 = vadd.f32 %v1996, %v2015
        %2017 = vdwg.mxu0
        %2018 = vmatpush.msra.mxu0 %v1754
        %2019 = vmatpush.msra.mxu0 %v1753
        %2020 = vmatpush.msra.mxu0 %v1752
        %2021 = vmatpush.msra.mxu0 %v1751
        %2022 = vmatpush.msra.mxu0 %v1750
        %2023 = vmatpush.msra.mxu0 %v1749
        %2024 = vmatpush.msra.mxu0 %v1748
        %2025 = vmatpush.msra.mxu0 %v1747
        %2026 = vmatpush.msra.mxu0 %v1746
        %2027 = vmatpush.msra.mxu0 %v1745
        %2028 = vmatpush.msra.mxu0 %v1744
        %2029 = vmatpush.msra.mxu0 %v1743
        %2030 = vmatpush.msra.mxu0 %v1742
        %2031 = vmatpush.msra.mxu0 %v1741
        %2032 = vmatpush.msra.mxu0 %v1740
        %2033 = vmatpush.msra.mxu0 %v1739
        %2034 = vmatmul.f32.gmra.mxu0 %v1907
        %v2035 = vpop.f32.mrf.mxu0
        %v2036 = vadd.f32 %v2016, %v2035
        %2037 = vdwg.mxu0
        %2038 = vmatpush.msra.mxu0 0.0
        %2039 = vmatpush.msra.mxu0 0.0
        %2040 = vmatpush.msra.mxu0 0.0
        %2041 = vmatpush.msra.mxu0 0.0
        %2042 = vmatpush.msra.mxu0 0.0
        %2043 = vmatpush.msra.mxu0 0.0
        %2044 = vmatpush.msra.mxu0 0.0
        %2045 = vmatpush.msra.mxu0 0.0
        %2046 = vmatpush.msra.mxu0 0.0
        %2047 = vmatpush.msra.mxu0 0.0
        %2048 = vmatpush.msra.mxu0 0.0
        %2049 = vmatpush.msra.mxu0 0.0
        %2050 = vmatpush.msra.mxu0 0.0
        %2051 = vmatpush.msra.mxu0 0.0
        %2052 = vmatpush.msra.mxu0 %v1756
        %2053 = vmatpush.msra.mxu0 %v1755
        %2054 = vmatmul.f32.gmra.mxu0 %v1916
        %v2055 = vpop.f32.mrf.mxu0
        %v2056 = vadd.f32 %v2036, %v2055
        %2057 = vdwg.mxu0
        %v2058 = vld [vmem:[%s8] sm:$0x1]
        %v2059 = vadd.f32 %v2056, %v2058
        %v2060 = vmax.f32 %v2059, 0.0
        %v2061 = vld [vmem:[%s9] sm:$0xff]
        %v2062 = vld [vmem:[%s9 + $0x8] sm:$0xff]
        %v2063 = vld [vmem:[%s9 + $0x10] sm:$0xff]
        %v2064 = vld [vmem:[%s9 + $0x18] sm:$0xff]
        %v2065 = vld [vmem:[%s9 + $0x20] sm:$0xff]
        %v2066 = vld [vmem:[%s9 + $0x28] sm:$0xff]
        %v2067 = vld [vmem:[%s9 + $0x30] sm:$0x3]
        %v2068 = vld [vmem:[%s10] sm:$0x1]
        %vm2069 = vcmask 408576
        %v2071 = vsel %vm2069, %v2060, 0
        %v2074 = vsel %vm764, %v2067, 0
        %2076 = vmatpush.msra.mxu0 0.0
        %2077 = vmatpush.msra.mxu0 0.0
        %2078 = vmatpush.msra.mxu0 0.0
        %2079 = vmatpush.msra.mxu0 0.0
        %2080 = vmatpush.msra.mxu0 0.0
        %2081 = vmatpush.msra.mxu0 0.0
        %2082 = vmatpush.msra.mxu0 0.0
        %2083 = vmatpush.msra.mxu0 0.0
        %2084 = vmatpush.msra.mxu0 0.0
        %2085 = vmatpush.msra.mxu0 %v2074
        %2086 = vmatpush.msra.mxu0 %v2066
        %2087 = vmatpush.msra.mxu0 %v2065
        %2088 = vmatpush.msra.mxu0 %v2064
        %2089 = vmatpush.msra.mxu0 %v2063
        %2090 = vmatpush.msra.mxu0 %v2062
        %2091 = vmatpush.msra.mxu0 %v2061
        %2092 = vmatmul.f32.gmra.mxu0 %v2071
        %v2093 = vpop.f32.mrf.mxu0
        %v2094 = vadd.f32 %v2068, %v2093
        %2095 = vdwg.mxu0
        %vm2096 = vcmask 73728
        %v2097 = vsel %vm2096, %v2094, -inf
        %2098 = vmax.xlane.f32.xlu0 %v2097
        %v2099 = vpop.xlane.xlu0 %2098
        %v2100 = vsub.f32 %v2094, %v2099
        %v2101 = vmul.f32 %v2100, 1.442695
        %v2102 = vpow.pop %v2101
        %v2103 = vsel %vm2096, %v2102, 0.0
        %2104 = vadd.xlane.f32.xlu0 %v2103
        %v2105 = vpop.xlane.xlu0 %2104
        %v2106 = vlog2.pop %v2105
        %v2107 = vmul.f32 %v2106, 0.6931472
        %v2108 = vsub.f32 %v2100, %v2107
        %2109 = vst.msk [vmem:[%s408] sm:$0x1] %vm2096, %v2108
        %s2110 = sand.u32 %s275, 1
        %s2111 = scalar_lea.sflag [#allocation4], %s2110
        %s2112 = sand.u32 %s275, 1
        %s2113 = scalar_lea.vmem [#allocation5], %s2112
        // Predicated region
        $region69: #{skipnet_forward.1} parent=63 // pred_check
          %p2114 = pneg %p285
        $region70: #{skipnet_forward.1} parent=63 // pred_check_branch
          %2116 = sbr.rel (%p2114) target = $region72
        $region71: #{skipnet_forward.1} parent=63 // pred_region
          %2118 = vsyncadd %s2111, 0
          %s2119 = scalar_lea.hbm %s11, %s26
          %s2121 = sshll.u32 %s2113, 4
          %s2122 = int_to_ptr.vmem [resolvable:$true] %s2121
          %s2123 = sshll.u32 %s2119, 4
          %s2124 = int_to_ptr.hbm [resolvable:$true] %s2123
          %2126 = dma.vmem_to_hbm [thread:$0]  %s2122, 16, %s2124, %s2111
        $region72: #{skipnet_forward.1} parent=63 // pred_fallthru
          _
      $region64: #{skipnet_forward.1} parent=5 // pred_fallthru
        _
      %p2127 = scmp.le.s32.totalorder 2, %s21
      // Predicated region
      $region73: #{skipnet_forward.1} parent=5 // pred_check
        %p2128 = pneg %p2127
      $region74: #{skipnet_forward.1} parent=5 // pred_check_branch
        %2130 = sbr.rel (%p2128) target = $region76
      $region75: #{skipnet_forward.1} parent=5 // pred_region
        %s2131 = ssub.s32 %s21, 2
        // Predicated region
        $region77: #{skipnet_forward.1} parent=75 // pred_check
          %p2132 = pneg %p291
        $region78: #{skipnet_forward.1} parent=75 // pred_check_branch
          %2134 = sbr.rel (%p2132) target = $region80
        $region79: #{skipnet_forward.1} parent=75 // pred_region
          %s2135 = sand.u32 %s276, 1
          %s2136 = scalar_lea.sflag [#allocation4], %s2135
          %s2137 = sand.u32 %s276, 1
          %s2138 = scalar_lea.vmem [#allocation5], %s2137
          %2140 = dma.done %s2136, 16
        $region80: #{skipnet_forward.1} parent=75 // pred_fallthru
          _
      $region76: #{skipnet_forward.1} parent=5 // pred_fallthru
        _
    $region6: #{skipnet_forward.1} parent=1 // loop_footer
      %s25 = sadd.s32 1, %s21
    $region7: #{skipnet_forward.1} parent=1 // loop_footer_branch
      %20 = sbr.rel target = $region3
    $region8: #{skipnet_forward.1} parent=1 // loop_exit
      _
    %2141 = vsyncpa [#allocation3], 1
    %s2142 = scalar_lea.sflag [#allocation3], 1
    %2143 = vsyncpa %s2142, 1
    %2144 = vsyncpa [#allocation4], 1
    %s2145 = scalar_lea.sflag [#allocation4], 1
    %2146 = vsyncpa %s2145, 1

</llo_original>
